<compile_context>
chip_gen: v7x
topology: tpu7x:2x2x1
jax: 0.10.0
libtpu: 0.0.40
codegen_flags: <defaults>
</compile_context>

<pallas_src>
import functools
import math

import jax
import jax.numpy as jnp
from jax.experimental import pallas as pl
from jax.experimental.pallas import tpu as pltpu


def _round_up(x, m):
    return (x + m - 1) // m * m


# --------------------------------------------------------------------------
# Generation-aware VMEM budgets
# --------------------------------------------------------------------------

def _vmem_capacity_bytes():
    try:
        info = pltpu.get_tpu_info()
        cap = getattr(info, "vmem_capacity_bytes", None)
        if cap:
            return int(cap)
    except Exception:
        pass
    return 64 * 2 ** 20      # conservative fallback (v7x per-core VMEM)


_VMEM_CAP = _vmem_capacity_bytes()
# Explicit scoped-VMEM limit (the v5e/v6e defaults are only ~16/32 MiB).
_VMEM_LIMIT = int(min(_VMEM_CAP * 3 // 4, 100 * 2 ** 20))
_DIRECT_BUDGET = int(_VMEM_LIMIT * 0.8)      # direct-conv working-set budget
_MM_BUDGET = int(_VMEM_LIMIT * 0.6)          # fused-matmul tile budget
_BN_BUDGET = int(min(12 * 2 ** 20, _VMEM_LIMIT // 4))


def _cparams(*semantics):
    return pltpu.CompilerParams(dimension_semantics=tuple(semantics),
                                vmem_limit_bytes=_VMEM_LIMIT)


def _pick_tile(x, cap, mult):
    """Tile size: a multiple of `mult`, <= cap.  Prefer a divisor of x so the
    wrapper never has to jnp.pad (an extra HBM read+write per call); otherwise
    return the cap and let the caller pad."""
    cap = max(mult, min(cap, _round_up(x, mult)))
    cap -= cap % mult
    if x % mult == 0:
        floor = max(mult, cap // 8)
        t = cap
        while t >= floor:
            if x % t == 0:
                return t
            t -= mult
    return cap


# --------------------------------------------------------------------------
# Fused tiled matmul (bf16 MXU, f32 acc) + BatchNorm statistics epilogue
# --------------------------------------------------------------------------

def _mm_kernel(a_ref, b_ref, o_ref, sum_ref, sq_ref, acc_ref):
    @pl.when(pl.program_id(2) == 0)
    def _():
        acc_ref[...] = jnp.zeros_like(acc_ref)

    acc_ref[...] += jnp.dot(a_ref[...], b_ref[...],
                            preferred_element_type=jnp.float32)

    @pl.when(pl.program_id(2) == pl.num_programs(2) - 1)
    def _():
        acc = acc_ref[...]
        o_ref[...] = acc.astype(o_ref.dtype)
        sum_ref[...] = jnp.broadcast_to(
            jnp.sum(acc, axis=0, keepdims=True), sum_ref.shape)
        sq_ref[...] = jnp.broadcast_to(
            jnp.sum(acc * acc, axis=0, keepdims=True), sq_ref.shape)


def fused_matmul(a, b, *, out_dtype=jnp.bfloat16):
    """(M,K)@(K,N): bf16 operands, f32 accumulation; also returns per-column
    sum and sum-of-squares of the f32 accumulator (free BN statistics)."""
    M, K = a.shape
    K2, N = b.shape
    assert K == K2
    tm = _pick_tile(M, 512, 8)
    tk = _pick_tile(K, 512, 128)
    tn = _pick_tile(N, 2048, 128)        # full-Cout tiles -> A streams once

    def tile_bytes(tm_, tk_, tn_):
        return (2 * tm_ * tk_ * 2 + 2 * tk_ * tn_ * 2 + 2 * tm_ * tn_ * 2
                + 4 * 8 * tn_ * 4 + tm_ * tn_ * 4)

    while tile_bytes(tm, tk, tn) > _MM_BUDGET and tn > 512:
        tn = _pick_tile(N, tn // 2, 128)
    while tile_bytes(tm, tk, tn) > _MM_BUDGET and tk > 128:
        tk = _pick_tile(K, tk // 2, 128)
    while tile_bytes(tm, tk, tn) > _MM_BUDGET and tm > 8:
        tm = _pick_tile(M, max(8, tm // 2), 8)

    Mp, Kp, Np = _round_up(M, tm), _round_up(K, tk), _round_up(N, tn)
    a_p = a.astype(jnp.bfloat16)
    b_p = b.astype(jnp.bfloat16)
    if (Mp, Kp) != (M, K):
        a_p = jnp.pad(a_p, ((0, Mp - M), (0, Kp - K)))
    if (Kp, Np) != (K, N):
        b_p = jnp.pad(b_p, ((0, Kp - K), (0, Np - N)))
    gi, gj, gk = Mp // tm, Np // tn, Kp // tk
    y, ps, pq = pl.pallas_call(
        _mm_kernel,
        out_shape=(jax.ShapeDtypeStruct((Mp, Np), out_dtype),
                   jax.ShapeDtypeStruct((gi * 8, Np), jnp.float32),
                   jax.ShapeDtypeStruct((gi * 8, Np), jnp.float32)),
        grid_spec=pltpu.PrefetchScalarGridSpec(
            num_scalar_prefetch=0,
            grid=(gi, gj, gk),
            in_specs=[pl.BlockSpec((tm, tk), lambda i, j, k: (i, k)),
                      pl.BlockSpec((tk, tn), lambda i, j, k: (k, j))],
            out_specs=(pl.BlockSpec((tm, tn), lambda i, j, k: (i, j)),
                       pl.BlockSpec((8, tn), lambda i, j, k: (i, j)),
                       pl.BlockSpec((8, tn), lambda i, j, k: (i, j))),
            scratch_shapes=[pltpu.VMEM((tm, tn), jnp.float32)]),
        compiler_params=_cparams("parallel", "parallel", "arbitrary"),
    )(a_p, b_p)
    sums = jnp.sum(ps.reshape(gi, 8, Np)[:, 0, :], axis=0)[:N]
    sqs = jnp.sum(pq.reshape(gi, 8, Np)[:, 0, :], axis=0)[:N]
    return y[:M, :N], sums, sqs


# --------------------------------------------------------------------------
# Direct stride-1 KxK conv: tap accumulation over shifted rows (no im2col)
# --------------------------------------------------------------------------

def _direct_conv_kernel(xp_ref, w_ref, o_ref, sum_ref, sq_ref, acc_ref, *,
                        taps, H, W, tm, pad_rows):
    i = pl.program_id(1)                          # row-block index
    base = pl.multiple_of(i * tm, 8)              # 8-aligned dynamic window
    # One aligned load of this block's halo window (bf16); the kh*kw taps are
    # static slices of the window -> no per-tap DMA, no dynamic unaligned refs.
    win = xp_ref[pl.ds(base, tm + 2 * pad_rows), :]
    row = i * tm + jax.lax.broadcasted_iota(jnp.int32, (tm, 1), 0)
    w_idx = row % W
    h_idx = (row // W) % H
    for t, (oi, oj) in enumerate(taps):
        s = pad_rows + oi * W + oj                # static, always in-bounds
        a = win[s:s + tm, :]
        if oi != 0 or oj != 0:
            # TODO(synk): a per-row-padded activation layout would remove these
            # boundary selects entirely; kept for layout simplicity.
            ok_h = jnp.logical_and(h_idx + oi >= 0, h_idx + oi < H)
            ok_w = jnp.logical_and(w_idx + oj >= 0, w_idx + oj < W)
            a = jnp.where(jnp.logical_and(ok_h, ok_w), a, jnp.zeros_like(a))
        contrib = jnp.dot(a, w_ref[t], preferred_element_type=jnp.float32)
        if t == 0:
            acc_ref[...] = contrib
        else:
            acc_ref[...] += contrib
    acc = acc_ref[...]
    o_ref[...] = acc.astype(o_ref.dtype)
    sum_ref[...] = jnp.broadcast_to(
        jnp.sum(acc, axis=0, keepdims=True), sum_ref.shape)
    sq_ref[...] = jnp.broadcast_to(
        jnp.sum(acc * acc, axis=0, keepdims=True), sq_ref.shape)


def direct_conv_s1(x_rows, shape_nhw, w_padded):
    """Stride-1 same-pad conv; whole (bf16) activation resident in VMEM."""
    N, H, W = shape_nhw
    M, cin = x_rows.shape
    cout_p, cin_w, kh, kw = w_padded.shape
    assert cin_w == cin
    p = kh // 2
    pad_rows = p * W + p
    tn = min(256, cout_p)                 # 256-wide MXU-matched output tiles
    tm = _pick_tile(M, 512, 8)
    if M // tm == 1 and cout_p // tn == 1 and M >= 16:
        # Guarantee >= 2 grid points (v7x has 2 TensorCores per chip).
        tm = _pick_tile(M, max(8, _round_up(M // 2, 8)), 8)
    Mp = _round_up(M, tm)
    xp = jnp.pad(x_rows.astype(jnp.bfloat16),
                 ((pad_rows, pad_rows + Mp - M), (0, 0)))
    wt = jnp.transpose(w_padded, (2, 3, 1, 0)).reshape(
        kh * kw, cin, cout_p).astype(jnp.bfloat16)
    taps = [(di - p, dj - p) for di in range(kh) for dj in range(kw)]
    gi, gj = Mp // tm, cout_p // tn
    kern = functools.partial(_direct_conv_kernel, taps=taps, H=H, W=W, tm=tm,
                             pad_rows=pad_rows)
    # Grid order: cout blocks outer, row blocks inner -> each weight block is
    # DMA'd once per cout block; the constant full-activation block once.
    y, ps, pq = pl.pallas_call(
        kern,
        out_shape=(jax.ShapeDtypeStruct((Mp, cout_p), jnp.bfloat16),
                   jax.ShapeDtypeStruct((gi * 8, cout_p), jnp.float32),
                   jax.ShapeDtypeStruct((gi * 8, cout_p), jnp.float32)),
        grid_spec=pltpu.PrefetchScalarGridSpec(
            num_scalar_prefetch=0,
            grid=(gj, gi),
            in_specs=[pl.BlockSpec((Mp + 2 * pad_rows, cin),
                                   lambda j, i: (0, 0)),
                      pl.BlockSpec((kh * kw, cin, tn),
                                   lambda j, i: (0, 0, j))],
            out_specs=(pl.BlockSpec((tm, tn), lambda j, i: (i, j)),
                       pl.BlockSpec((8, tn), lambda j, i: (i, j)),
                       pl.BlockSpec((8, tn), lambda j, i: (i, j))),
            scratch_shapes=[pltpu.VMEM((tm, tn), jnp.float32)]),
        compiler_params=_cparams("parallel", "parallel"),
    )(xp, wt)
    sums = jnp.sum(ps.reshape(gi, 8, cout_p)[:, 0, :], axis=0)
    sqs = jnp.sum(pq.reshape(gi, 8, cout_p)[:, 0, :], axis=0)
    return y[:M], sums, sqs, (N, H, W)


def _direct_conv_fits(M, cin, cout_p, kh, kw, pad_rows, budget=None):
    if budget is None:
        budget = _DIRECT_BUDGET
    tn = min(256, cout_p)
    tm = min(512, _round_up(M, 8))
    xp_b = 2 * (M + 2 * pad_rows + tm) * cin * 2     # bf16, double-buffered
    w_b = 2 * kh * kw * cin * tn * 2
    o_b = 2 * tm * tn * 2
    st_b = 4 * 8 * tn * 4
    acc_b = tm * tn * 4
    tmp_b = 4 * (tm + 2 * pad_rows) * cin * 2        # halo window + tap temps
    return xp_b + w_b + o_b + st_b + acc_b + tmp_b < budget


# --------------------------------------------------------------------------
# BatchNorm affine (+ residual) + ReLU elementwise kernels
# --------------------------------------------------------------------------

def _affine_kernel(x_ref, scale_ref, bias_ref, o_ref, *, relu):
    y = x_ref[...].astype(jnp.float32) * scale_ref[...] + bias_ref[...]
    if relu:
        y = jnp.maximum(y, 0.0)
    o_ref[...] = y.astype(o_ref.dtype)


def _affine_res_kernel(x_ref, r_ref, scale_ref, bias_ref, o_ref, *, relu):
    y = (x_ref[...].astype(jnp.float32) * scale_ref[...] + bias_ref[...]
         + r_ref[...].astype(jnp.float32))
    if relu:
        y = jnp.maximum(y, 0.0)
    o_ref[...] = y.astype(o_ref.dtype)


def bn_affine_act(x, scale, bias, residual=None, relu=True):
    # TODO(synk): folding this affine+ReLU into the consumer conv's operand
    # load would save one activation write+read per layer; kept standalone
    # because residual joins make that fusion non-local.
    M, C = x.shape
    cap = max(8, min(512, (_BN_BUDGET // (20 * C)) // 8 * 8))
    tm = _pick_tile(M, cap, 8)
    Mp = _round_up(M, tm)
    x_p = jnp.pad(x, ((0, Mp - M), (0, 0))) if Mp != M else x
    scale2 = scale.reshape(1, C).astype(jnp.float32)
    bias2 = bias.reshape(1, C).astype(jnp.float32)
    row_spec = pl.BlockSpec((tm, C), lambda i: (i, 0))
    vec_spec = pl.BlockSpec((1, C), lambda i: (0, 0))
    if residual is None:
        kern = functools.partial(_affine_kernel, relu=relu)
        in_specs = [row_spec, vec_spec, vec_spec]
        args = (x_p, scale2, bias2)
    else:
        r_p = (jnp.pad(residual, ((0, Mp - M), (0, 0)))
               if Mp != M else residual)
        kern = functools.partial(_affine_res_kernel, relu=relu)
        in_specs = [row_spec, row_spec, vec_spec, vec_spec]
        args = (x_p, r_p, scale2, bias2)
    out = pl.pallas_call(
        kern,
        out_shape=jax.ShapeDtypeStruct((Mp, C), jnp.bfloat16),
        grid_spec=pltpu.PrefetchScalarGridSpec(
            num_scalar_prefetch=0,
            grid=(Mp // tm,),
            in_specs=in_specs,
            out_specs=row_spec),
        compiler_params=_cparams("parallel"),
    )(*args)
    return out[:M] if Mp != M else out


# --------------------------------------------------------------------------
# Separable 3x3 / stride-2 / pad-1 max pool
# --------------------------------------------------------------------------
# TODO(synk): a one-pass Pallas pooling kernel would halve the HBM traffic of
# this stage; kept separable since the stem pool is a small fraction of total.

def _max3_kernel(a_ref, b_ref, c_ref, o_ref):
    o_ref[...] = jnp.maximum(jnp.maximum(a_ref[...], b_ref[...]), c_ref[...])


def _pallas_max3(a, b, c):
    M, C = a.shape
    tm = _pick_tile(M, 512, 8)
    Mp = _round_up(M, tm)
    if Mp != M:
        a = jnp.pad(a, ((0, Mp - M), (0, 0)))
        b = jnp.pad(b, ((0, Mp - M), (0, 0)))
        c = jnp.pad(c, ((0, Mp - M), (0, 0)))
    spec = pl.BlockSpec((tm, C), lambda i: (i, 0))
    out = pl.pallas_call(
        _max3_kernel,
        out_shape=jax.ShapeDtypeStruct((Mp, C), a.dtype),
        grid_spec=pltpu.PrefetchScalarGridSpec(
            num_scalar_prefetch=0,
            grid=(Mp // tm,),
            in_specs=[spec, spec, spec],
            out_specs=spec),
        compiler_params=_cparams("parallel"),
    )(a, b, c)
    return out[:M] if Mp != M else out


def maxpool2d(x_rows, shape_nhw):
    N, H, W = shape_nhw
    C = x_rows.shape[1]
    x = x_rows.reshape(N, H, W, C)
    Wo = (W - 1) // 2 + 1
    Ho = (H - 1) // 2 + 1
    xw = jnp.pad(x, ((0, 0), (0, 0), (1, 1), (0, 0)), constant_values=-1e30)
    cols = [xw[:, :, j:j + 2 * Wo - 1:2, :].reshape(N * H * Wo, C)
            for j in range(3)]
    yw = _pallas_max3(*cols).reshape(N, H, Wo, C)
    xh = jnp.pad(yw, ((0, 0), (1, 1), (0, 0), (0, 0)), constant_values=-1e30)
    rows = [xh[:, i:i + 2 * Ho - 1:2, :, :].reshape(N * Ho * Wo, C)
            for i in range(3)]
    y = _pallas_max3(*rows)
    return y, (N, Ho, Wo)


# --------------------------------------------------------------------------
# Conv + BatchNorm + (residual) + ReLU dispatcher
# --------------------------------------------------------------------------

def _extract_patches(x_nhwc, kh, kw, stride, pad):
    N, H, W, C = x_nhwc.shape
    Ho = (H + 2 * pad - kh) // stride + 1
    Wo = (W + 2 * pad - kw) // stride + 1
    xp = jnp.pad(x_nhwc, ((0, 0), (pad, pad), (pad, pad), (0, 0)))
    cols = []
    for i in range(kh):
        for j in range(kw):
            cols.append(xp[:, i:i + stride * (Ho - 1) + 1:stride,
                           j:j + stride * (Wo - 1) + 1:stride, :])
    patches = jnp.stack(cols, axis=3)   # (N, Ho, Wo, kh*kw, C)
    return patches, Ho, Wo


def _pad_conv_weight(w, cin_p, cout_p):
    cout, cin, kh, kw = w.shape
    return jnp.pad(w, ((0, cout_p - cout), (0, cin_p - cin), (0, 0), (0, 0)))


def conv_bn_act(x_rows, shape_nhw, w, gamma, beta, stride,
                residual=None, relu=True, eps=1e-5):
    """Bias-free conv -> BatchNorm (per-batch stats) -> (+res) -> ReLU."""
    N, H, W = shape_nhw
    cin_p = x_rows.shape[1]
    cout, cin, kh, kw = w.shape
    cout_p = _round_up(cout, 128)
    w_p = _pad_conv_weight(w, cin_p, cout_p)
    pad = kh // 2

    if kh == 1 and kw == 1:
        if stride != 1:
            xs = x_rows.reshape(N, H, W, cin_p)[:, ::stride, ::stride, :]
            Ho, Wo = xs.shape[1], xs.shape[2]
            x_in = xs.reshape(N * Ho * Wo, cin_p)
        else:
            Ho, Wo, x_in = H, W, x_rows
        y, sums, sqs = fused_matmul(x_in, w_p[:, :, 0, 0].T)
        out_shape = (N, Ho, Wo)
    elif stride == 1 and _direct_conv_fits(x_rows.shape[0], cin_p, cout_p,
                                           kh, kw, pad * W + pad):
        y, sums, sqs, out_shape = direct_conv_s1(x_rows, shape_nhw, w_p)
    else:
        # TODO(synk): strided KxK convs (stem 7x7/s2, 3x3/s2 downsamples) still
        # go through an im2col GEMM; a phase-decomposed direct kernel would
        # remove the remaining patch materialization.
        x_nhwc = x_rows.reshape(N, H, W, cin_p)
        patches, Ho, Wo = _extract_patches(x_nhwc, kh, kw, stride, pad)
        a = patches.reshape(N * Ho * Wo, kh * kw * cin_p)
        b = jnp.transpose(w_p, (2, 3, 1, 0)).reshape(kh * kw * cin_p, cout_p)
        y, sums, sqs = fused_matmul(a, b)
        out_shape = (N, Ho, Wo)

    count = out_shape[0] * out_shape[1] * out_shape[2]
    gamma_p = jnp.pad(gamma.astype(jnp.float32), (0, cout_p - cout),
                      constant_values=1.0)
    beta_p = jnp.pad(beta.astype(jnp.float32), (0, cout_p - cout))
    mean = sums / count
    # E[x^2]-mean^2 in f32 from the f32 accumulator; clamp tiny negatives.
    # NOTE: can cancel for channels with |mean| >> std; acceptable for conv
    # activations, flagged as a known approximation.
    var = jnp.maximum(sqs / count - mean * mean, 0.0)
    invstd = jax.lax.rsqrt(var + eps)
    scale = gamma_p * invstd
    bias = beta_p - mean * scale
    y = bn_affine_act(y, scale, bias, residual=residual, relu=relu)
    return y, out_shape


# --------------------------------------------------------------------------
# Parameter construction (deterministic, mirrors ResNet.__init__)
# --------------------------------------------------------------------------

_CONFIGS = {
    'ResNet18': (64, [64, 128, 256, 512], [2, 2, 2, 2], False),
    'ResNet34': (64, [64, 128, 256, 512], [3, 4, 6, 3], False),
    'ResNet50': (64, [256, 512, 1024, 2048], [3, 4, 6, 3], True),
    'ResNet101': (64, [256, 512, 1024, 2048], [3, 4, 23, 3], True),
    'ResNet152': (64, [256, 512, 1024, 2048], [3, 8, 36, 3], True),
}


def _he_normal(key, shape, fan_in):
    return jax.random.normal(key, shape, jnp.float32) * math.sqrt(2.0 / fan_in)


def init_resnet_params(key, dim_input=3, dim_output=1000, model='ResNet50'):
    dim_stem, dim_blocks, num_blocks, bottleneck = _CONFIGS[model]
    params = {}
    key, k = jax.random.split(key)
    params['stem_conv_w'] = _he_normal(k, (dim_stem, dim_input, 7, 7),
                                       dim_input * 49)
    params['stem_bn'] = (jnp.ones(dim_stem), jnp.zeros(dim_stem))
    blks = []
    for stage_id in range(4):
        for block_id in range(num_blocks[stage_id]):
            if block_id == 0:
                if stage_id == 0:
                    stride, ratio, in_f = 1, 1, dim_stem
                else:
                    stride, ratio, in_f = 2, 2, dim_blocks[stage_id - 1]
            else:
                stride, ratio, in_f = 1, 4, dim_blocks[stage_id]
            out_f = dim_blocks[stage_id]
            blk = {'stride': stride, 'bottleneck': bottleneck}
            if bottleneck:
                hidden = in_f // ratio
                key, k1, k2, k3 = jax.random.split(key, 4)
                blk['w1'] = _he_normal(k1, (hidden, in_f, 1, 1), in_f)
                blk['bn1'] = (jnp.ones(hidden), jnp.zeros(hidden))
                blk['w2'] = _he_normal(k2, (hidden, hidden, 3, 3), hidden * 9)
                blk['bn2'] = (jnp.ones(hidden), jnp.zeros(hidden))
                blk['w3'] = _he_normal(k3, (out_f, hidden, 1, 1), hidden)
                blk['bn3'] = (jnp.ones(out_f), jnp.zeros(out_f))
            else:
                key, k1, k2 = jax.random.split(key, 3)
                blk['w1'] = _he_normal(k1, (out_f, in_f, 3, 3), in_f * 9)
                blk['bn1'] = (jnp.ones(out_f), jnp.zeros(out_f))
                blk['w2'] = _he_normal(k2, (out_f, out_f, 3, 3), out_f * 9)
                blk['bn2'] = (jnp.ones(out_f), jnp.zeros(out_f))
            if stride != 1 or in_f != out_f:
                key, kd = jax.random.split(key)
                blk['wd'] = _he_normal(kd, (out_f, in_f, 1, 1), in_f)
                blk['bnd'] = (jnp.ones(out_f), jnp.zeros(out_f))
            blks.append(blk)
    params['blocks'] = blks
    key, khd = jax.random.split(key)
    params['head_w'] = _he_normal(khd, (dim_output, dim_blocks[-1]),
                                  dim_blocks[-1])
    params['head_b'] = jnp.zeros(dim_output, jnp.float32)
    return params


# --------------------------------------------------------------------------
# Forward pass (mirrors ResNet.forward)
# --------------------------------------------------------------------------

def resnet_forward(params, x_nchw):
    N, Cin, H, W = x_nchw.shape
    x = jnp.transpose(x_nchw, (0, 2, 3, 1)).reshape(N * H * W, Cin)
    x = x.astype(jnp.bfloat16)
    shape = (N, H, W)

    # ---- stem: conv7x7/s2 + BN + ReLU + maxpool3x3/s2 ----
    g, b = params['stem_bn']
    x, shape = conv_bn_act(x, shape, params['stem_conv_w'], g, b, stride=2,
                           relu=True)
    x, shape = maxpool2d(x, shape)

    # ---- residual blocks (joined post-activation) ----
    for blk in params['blocks']:
        stride = blk['stride']
        if 'wd' in blk:   # projection shortcut: conv1x1/stride + BN (no act)
            g, b = blk['bnd']
            r, _ = conv_bn_act(x, shape, blk['wd'], g, b, stride=stride,
                               relu=False)
        else:
            r = x
        if blk['bottleneck']:
            g, b = blk['bn1']
            y, s = conv_bn_act(x, shape, blk['w1'], g, b, stride=1, relu=True)
            g, b = blk['bn2']
            y, s = conv_bn_act(y, s, blk['w2'], g, b, stride=stride, relu=True)
            g, b = blk['bn3']
            y, s = conv_bn_act(y, s, blk['w3'], g, b, stride=1, residual=r,
                               relu=True)
        else:
            g, b = blk['bn1']
            y, s = conv_bn_act(x, shape, blk['w1'], g, b, stride=stride,
                               relu=True)
            g, b = blk['bn2']
            y, s = conv_bn_act(y, s, blk['w2'], g, b, stride=1, residual=r,
                               relu=True)
        x, shape = y, s

    # ---- head: GlobalAvgPool2d + Linear ----
    N_, Ho, Wo = shape
    C = x.shape[1]
    pooled = x.astype(jnp.float32).reshape(N_, Ho * Wo, C).mean(axis=1)
    w_h = params['head_w']
    w_hp = jnp.pad(w_h, ((0, 0), (0, C - w_h.shape[1])))
    logits, _, _ = fused_matmul(pooled, w_hp.T, out_dtype=jnp.float32)
    return logits + params['head_b'][None, :]


if __name__ == "__main__":
    key = jax.random.PRNGKey(0)
    key_p, key_x = jax.random.split(key)
    params = init_resnet_params(key_p, dim_input=3, dim_output=16,
                                model='ResNet18')
    x = jax.random.normal(key_x, (2, 3, 64, 64), jnp.float32)
    out = resnet_forward(params, x)
    out = jax.block_until_ready(out)
    assert out.shape == (2, 16)
    assert bool(jnp.all(jnp.isfinite(out)))
    print("KERNEL_OK")
</pallas_src>

<mosaic_0001>
module attributes {stable_mosaic.version = 11 : i64} {
  func.func @_mm_kernel(%arg0: i32, %arg1: i32, %arg2: i32, %arg3: memref<512x256xbf16, #tpu.memory_space<vmem>>, %arg4: memref<256x128xbf16, #tpu.memory_space<vmem>>, %arg5: memref<512x128xbf16, #tpu.memory_space<vmem>>, %arg6: memref<8x128xf32, #tpu.memory_space<vmem>>, %arg7: memref<8x128xf32, #tpu.memory_space<vmem>>, %arg8: memref<512x128xf32, #tpu.memory_space<vmem>>) attributes {dimension_semantics = [#tpu.dimension_semantics<parallel>, #tpu.dimension_semantics<parallel>, #tpu.dimension_semantics<arbitrary>], iteration_bounds = array<i64: 4, 1, 1>, scalar_prefetch = 0 : i64, scratch_operands = 1 : i64, tpu.core_type = #tpu.core_type<tc>, window_params = [{transform_indices = @transform_0, window_bounds = array<i64: 512, 256>}, {transform_indices = @transform_1, window_bounds = array<i64: 256, 128>}, {transform_indices = @transform_2, window_bounds = array<i64: 512, 128>}, {transform_indices = @transform_3, window_bounds = array<i64: 8, 128>}, {transform_indices = @transform_4, window_bounds = array<i64: 8, 128>}]} {
    %c0_i32 = arith.constant 0 : i32
    %0 = arith.cmpi eq, %arg2, %c0_i32 : i32
    %1 = arith.extui %0 : i1 to i32
    %c0_i32_0 = arith.constant 0 : i32
    %2 = arith.cmpi ne, %1, %c0_i32_0 : i32
    scf.if %2 {
      %cst_10 = arith.constant 0.000000e+00 : f32
      %12 = vector.broadcast %cst_10 : f32 to vector<512x128xf32>
      %c0_11 = arith.constant 0 : index
      %c0_12 = arith.constant 0 : index
      %13 = vector.load %arg8[%c0_11, %c0_12] : memref<512x128xf32, #tpu.memory_space<vmem>>, vector<512x128xf32>
      tpu.vector_store %arg8[%c0_11, %c0_12], %12 {strides = array<i32>} : memref<512x128xf32, #tpu.memory_space<vmem>>, vector<512x128xf32>,
    } else {
    }
    %c0 = arith.constant 0 : index
    %c0_1 = arith.constant 0 : index
    %3 = vector.load %arg8[%c0, %c0_1] : memref<512x128xf32, #tpu.memory_space<vmem>>, vector<512x128xf32>
    %c0_2 = arith.constant 0 : index
    %c0_3 = arith.constant 0 : index
    %4 = vector.load %arg3[%c0_2, %c0_3] : memref<512x256xbf16, #tpu.memory_space<vmem>>, vector<512x256xbf16>
    %c0_4 = arith.constant 0 : index
    %c0_5 = arith.constant 0 : index
    %5 = vector.load %arg4[%c0_4, %c0_5] : memref<256x128xbf16, #tpu.memory_space<vmem>>, vector<256x128xbf16>
    %cst = arith.constant dense<0.000000e+00> : vector<512x128xf32>
    %6 = tpu.matmul %4, %5, %cst {dimension_numbers = #tpu.dot_dimension_numbers<[1], [0], [0], [1], [0, 0, 1, 1], [], []>} : vector<512x256xbf16>, vector<256x128xbf16>, vector<512x128xf32> -> vector<512x128xf32>
    %7 = arith.addf %3, %6 : vector<512x128xf32>
    %c0_6 = arith.constant 0 : index
    %c0_7 = arith.constant 0 : index
    %8 = vector.load %arg8[%c0_6, %c0_7] : memref<512x128xf32, #tpu.memory_space<vmem>>, vector<512x128xf32>
    tpu.vector_store %arg8[%c0_6, %c0_7], %7 {strides = array<i32>} : memref<512x128xf32, #tpu.memory_space<vmem>>, vector<512x128xf32>,
    %c0_i32_8 = arith.constant 0 : i32
    %9 = arith.cmpi eq, %arg2, %c0_i32_8 : i32
    %10 = arith.extui %9 : i1 to i32
    %c0_i32_9 = arith.constant 0 : i32
    %11 = arith.cmpi ne, %10, %c0_i32_9 : i32
    scf.if %11 {
      %c0_10 = arith.constant 0 : index
      %c0_11 = arith.constant 0 : index
      %12 = vector.load %arg8[%c0_10, %c0_11] : memref<512x128xf32, #tpu.memory_space<vmem>>, vector<512x128xf32>
      %13 = arith.truncf %12 : vector<512x128xf32> to vector<512x128xbf16>
      %c0_12 = arith.constant 0 : index
      %c0_13 = arith.constant 0 : index
      %14 = vector.load %arg5[%c0_12, %c0_13] : memref<512x128xbf16, #tpu.memory_space<vmem>>, vector<512x128xbf16>
      tpu.vector_store %arg5[%c0_12, %c0_13], %13 {strides = array<i32>} : memref<512x128xbf16, #tpu.memory_space<vmem>>, vector<512x128xbf16>,
      %cst_14 = arith.constant dense<0.000000e+00> : vector<128xf32>
      %15 = vector.multi_reduction <add>, %12, %cst_14 [0] : vector<512x128xf32> to vector<128xf32>
      %16 = vector.shape_cast %15 : vector<128xf32> to vector<1x128xf32>
      %17 = vector.shape_cast %16 : vector<1x128xf32> to vector<1x128xf32>
      %18 = vector.broadcast %17 : vector<1x128xf32> to vector<8x128xf32>
      %c0_15 = arith.constant 0 : index
      %c0_16 = arith.constant 0 : index
      %19 = vector.load %arg6[%c0_15, %c0_16] : memref<8x128xf32, #tpu.memory_space<vmem>>, vector<8x128xf32>
      tpu.vector_store %arg6[%c0_15, %c0_16], %18 {strides = array<i32>} : memref<8x128xf32, #tpu.memory_space<vmem>>, vector<8x128xf32>,
      %20 = arith.mulf %12, %12 : vector<512x128xf32>
      %cst_17 = arith.constant dense<0.000000e+00> : vector<128xf32>
      %21 = vector.multi_reduction <add>, %20, %cst_17 [0] : vector<512x128xf32> to vector<128xf32>
      %22 = vector.shape_cast %21 : vector<128xf32> to vector<1x128xf32>
      %23 = vector.shape_cast %22 : vector<1x128xf32> to vector<1x128xf32>
      %24 = vector.broadcast %23 : vector<1x128xf32> to vector<8x128xf32>
      %c0_18 = arith.constant 0 : index
      %c0_19 = arith.constant 0 : index
      %25 = vector.load %arg7[%c0_18, %c0_19] : memref<8x128xf32, #tpu.memory_space<vmem>>, vector<8x128xf32>
      tpu.vector_store %arg7[%c0_18, %c0_19], %24 {strides = array<i32>} : memref<8x128xf32, #tpu.memory_space<vmem>>, vector<8x128xf32>,
    } else {
    }
    return
  }
  func.func @transform_0(%arg0: i32, %arg1: i32, %arg2: i32) -> (i32, i32) {
    %c0_i32 = arith.constant 0 : i32
    return %arg0, %arg2 : i32, i32
  }
  func.func @transform_1(%arg0: i32, %arg1: i32, %arg2: i32) -> (i32, i32) {
    %c0_i32 = arith.constant 0 : i32
    return %arg2, %arg1 : i32, i32
  }
  func.func @transform_2(%arg0: i32, %arg1: i32, %arg2: i32) -> (i32, i32) {
    %c0_i32 = arith.constant 0 : i32
    return %arg0, %arg1 : i32, i32
  }
  func.func @transform_3(%arg0: i32, %arg1: i32, %arg2: i32) -> (i32, i32) {
    %c0_i32 = arith.constant 0 : i32
    return %arg0, %arg1 : i32, i32
  }
  func.func @transform_4(%arg0: i32, %arg1: i32, %arg2: i32) -> (i32, i32) {
    %c0_i32 = arith.constant 0 : i32
    return %arg0, %arg1 : i32, i32
  }
}

</mosaic_0001>

<llo_original>
// kernel: tpu_custom_call.1
$region0: #{tpu_custom_call.1}
  #allocation0 [shape = 'u32[]', space=smem, size = 0x4, offset = 0x4, fixed_abs, tag = 'smem constant byte address 0x4 - core index']
  #allocation1 [shape = 'u32[144,128]{1,0:T(1,128)}', space=vmem, size = 0x12000, scoped, tag = 'internal scratch']
  #allocation2 [shape = 'f32[512,128]{1,0:T(8,128)}', space=vmem, size = 0x40000, scoped, tag = 'scratch operand']
  %s0 = inlined_call_operand.hbm [shape: bf16[2048,256], index: 0, kind: input, shape index: {}]
  %s1 = inlined_call_operand.hbm [shape: bf16[256,128], index: 1, kind: input, shape index: {}]
  %s2 = inlined_call_operand.hbm [shape: bf16[2048,128], index: 2, kind: output, shape index: {0}]
  %s3 = inlined_call_operand.hbm [shape: f32[32,128], index: 3, kind: output, shape index: {1}]
  %s4 = inlined_call_operand.hbm [shape: f32[32,128], index: 4, kind: output, shape index: {2}]
  %5 = xla_tuple %s2, %s3, %s4
  %s6 = sld [smem:[#allocation0]]
  $region73: #{tpu_custom_call.1} parent=0
    _
  %s8 = ssub.s32 1, %s6
  %s9 = scalar_select 0, %s8, %s6
  $region1: #{tpu_custom_call.1} parent=0
    #allocation3 [shape = 'u8[524288]{0}', space=vmem, size = 0x80000, scoped, tag = 'input window, operand 0']
    #allocation4 [shape = 's32[2]{0}', space=sflag, size = 0x8, scoped, tag = 'scoped memory for tpu_custom_call.1']
    #allocation5 [shape = 's32[2]{0}', space=sflag, size = 0x8, scoped, tag = 'scoped memory for tpu_custom_call.1']
    #allocation6 [shape = 'u8[65536]{0}', space=vmem, size = 0x10000, scoped, tag = 'input window, operand 1, single buffered']
    #allocation7 [shape = 's32[1]{0}', space=sflag, size = 0x4, scoped, tag = 'scoped memory for tpu_custom_call.1']
    #allocation8 [shape = 'u8[262144]{0}', space=vmem, size = 0x40000, scoped, tag = 'output window, operand 0']
    #allocation9 [shape = 'u8[8192]{0}', space=vmem, size = 0x2000, scoped, tag = 'output window, operand 1']
    #allocation10 [shape = 's32[2]{0}', space=sflag, size = 0x8, scoped, tag = 'scoped memory for tpu_custom_call.1']
    #allocation11 [shape = 'u8[8192]{0}', space=vmem, size = 0x2000, scoped, tag = 'output window, operand 2']
    %10 = vsyncpa [#allocation4], 0
    %s11 = scalar_lea.sflag [#allocation4], 1
    %12 = vsyncpa %s11, 0
    %13 = vsyncpa [#allocation7], 0
    %14 = vsyncpa [#allocation5], 0
    %s15 = scalar_lea.sflag [#allocation5], 1
    %16 = vsyncpa %s15, 0
    %17 = vsyncpa [#allocation10], 0
    %s18 = scalar_lea.sflag [#allocation10], 1
    %19 = vsyncpa %s18, 0
    loop: start=0, step=1, limit=6
    $region2: #{tpu_custom_call.1} parent=1 // loop_pre_header
      _
    $region3: #{tpu_custom_call.1} parent=1 // loop_header
      %s21 = sphi 0, %s25
      %p22 = scmp.ge.s32.totalorder %s21, 6
      %s28 = sphi 0, %s47
      %s29 = sphi 0, %s43
      %s30 = sphi 0, %s39
      %s31 = sphi 0, %s28
      %s32 = sphi 0, %s29
      %s33 = sphi 0, %s30
      %s34 = sphi 0, %s31
      %s35 = sphi 0, %s32
      %s36 = sphi 0, %s33
      %s52 = sphi 0, %s54
      %s55 = sphi 0, %s52
      %s56 = sphi 0, %s55
      %s72 = sphi 0, %s56
      %s80 = sphi 0, %s82
      %s83 = sphi 0, %s80
      %s84 = sphi 0, %s83
      %s100 = sphi 0, %s84
      %s108 = sphi 0, %s110
      %s111 = sphi 0, %s108
      %s112 = sphi 0, %s111
      %s128 = sphi 0, %s112
      %s136 = sphi 0, %s138
      %s139 = sphi 0, %s136
      %s140 = sphi 0, %s139
      %s156 = sphi 0, %s140
      %s164 = sphi 0, %s166
      %s167 = sphi 0, %s164
      %s168 = sphi 0, %s167
      %s184 = sphi 0, %s168
    $region4: #{tpu_custom_call.1} parent=1 // loop_header_branch
      %24 = sbr.rel (%p22) target = $region8
    $region5: #{tpu_custom_call.1} parent=1 // loop_body
      %s26 = ssub.s32 %s21, 1
      %s27 = ssub.s32 %s21, 2
      %s37 = sadd.s32 1, %s30
      %p38 = scmp.ge.s32.totalorder %s37, 1
      %s39 = scalar_select %p38, 0, %s37
      %s40 = sadd.s32 1, %s29
      %s41 = scalar_select %p38, %s40, %s29
      %p42 = scmp.ge.s32.totalorder %s41, 1
      %s43 = scalar_select %p42, 0, %s41
      %s44 = sadd.s32 1, %s28
      %s45 = scalar_select %p42, %s44, %s28
      %p46 = scmp.ge.s32.totalorder %s45, 4
      %s47 = scalar_select %p46, 0, %s45
      %s48 = ssub.s32 %s28, %s47
      %s49 = ssub.s32 %s30, %s39
      %s50 = sor.u32 %s48, %s49
      %p51 = scmp.eq.s32.totalorder %s50, 0
      %s53 = sadd.s32 %s52, 1
      %s54 = scalar_select %p51, %s52, %s53
      %p57 = pneg %p51
      %p58 = scmp.eq.s32.totalorder %s21, 3
      %p59 = por %p57, %p58
      %p60 = scmp.ne.s32.totalorder %s52, %s55
      %p61 = scmp.eq.s32.totalorder %s21, 0
      %p62 = por %p60, %p61
      %p63 = scmp.ne.s32.totalorder %s52, %s55
      %p64 = scmp.eq.s32.totalorder %s26, 3
      %p65 = por %p63, %p64
      %p66 = scmp.ne.s32.totalorder %s55, %s56
      %p67 = scmp.eq.s32.totalorder %s26, 0
      %p68 = por %p66, %p67
      %p69 = scmp.ne.s32.totalorder %s55, %s56
      %p70 = scmp.eq.s32.totalorder %s27, 3
      %p71 = por %p69, %p70
      %p73 = scmp.ne.s32.totalorder %s56, %s72
      %p74 = scmp.eq.s32.totalorder %s27, 0
      %p75 = por %p73, %p74
      %s76 = ssub.s32 %s30, %s39
      %s77 = ssub.s32 %s29, %s43
      %s78 = sor.u32 %s76, %s77
      %p79 = scmp.eq.s32.totalorder %s78, 0
      %s81 = sadd.s32 %s80, 1
      %s82 = scalar_select %p79, %s80, %s81
      %p85 = pneg %p79
      %p86 = scmp.eq.s32.totalorder %s21, 3
      %p87 = por %p85, %p86
      %p88 = scmp.ne.s32.totalorder %s80, %s83
      %p89 = scmp.eq.s32.totalorder %s21, 0
      %p90 = por %p88, %p89
      %p91 = scmp.ne.s32.totalorder %s80, %s83
      %p92 = scmp.eq.s32.totalorder %s26, 3
      %p93 = por %p91, %p92
      %p94 = scmp.ne.s32.totalorder %s83, %s84
      %p95 = scmp.eq.s32.totalorder %s26, 0
      %p96 = por %p94, %p95
      %p97 = scmp.ne.s32.totalorder %s83, %s84
      %p98 = scmp.eq.s32.totalorder %s27, 3
      %p99 = por %p97, %p98
      %p101 = scmp.ne.s32.totalorder %s84, %s100
      %p102 = scmp.eq.s32.totalorder %s27, 0
      %p103 = por %p101, %p102
      %s104 = ssub.s32 %s28, %s47
      %s105 = ssub.s32 %s29, %s43
      %s106 = sor.u32 %s104, %s105
      %p107 = scmp.eq.s32.totalorder %s106, 0
      %s109 = sadd.s32 %s108, 1
      %s110 = scalar_select %p107, %s108, %s109
      %p113 = pneg %p107
      %p114 = scmp.eq.s32.totalorder %s21, 3
      %p115 = por %p113, %p114
      %p116 = scmp.ne.s32.totalorder %s108, %s111
      %p117 = scmp.eq.s32.totalorder %s21, 0
      %p118 = por %p116, %p117
      %p119 = scmp.ne.s32.totalorder %s108, %s111
      %p120 = scmp.eq.s32.totalorder %s26, 3
      %p121 = por %p119, %p120
      %p122 = scmp.ne.s32.totalorder %s111, %s112
      %p123 = scmp.eq.s32.totalorder %s26, 0
      %p124 = por %p122, %p123
      %p125 = scmp.ne.s32.totalorder %s111, %s112
      %p126 = scmp.eq.s32.totalorder %s27, 3
      %p127 = por %p125, %p126
      %p129 = scmp.ne.s32.totalorder %s112, %s128
      %p130 = scmp.eq.s32.totalorder %s27, 0
      %p131 = por %p129, %p130
      %s132 = ssub.s32 %s28, %s47
      %s133 = ssub.s32 %s29, %s43
      %s134 = sor.u32 %s132, %s133
      %p135 = scmp.eq.s32.totalorder %s134, 0
      %s137 = sadd.s32 %s136, 1
      %s138 = scalar_select %p135, %s136, %s137
      %p141 = pneg %p135
      %p142 = scmp.eq.s32.totalorder %s21, 3
      %p143 = por %p141, %p142
      %p144 = scmp.ne.s32.totalorder %s136, %s139
      %p145 = scmp.eq.s32.totalorder %s21, 0
      %p146 = por %p144, %p145
      %p147 = scmp.ne.s32.totalorder %s136, %s139
      %p148 = scmp.eq.s32.totalorder %s26, 3
      %p149 = por %p147, %p148
      %p150 = scmp.ne.s32.totalorder %s139, %s140
      %p151 = scmp.eq.s32.totalorder %s26, 0
      %p152 = por %p150, %p151
      %p153 = scmp.ne.s32.totalorder %s139, %s140
      %p154 = scmp.eq.s32.totalorder %s27, 3
      %p155 = por %p153, %p154
      %p157 = scmp.ne.s32.totalorder %s140, %s156
      %p158 = scmp.eq.s32.totalorder %s27, 0
      %p159 = por %p157, %p158
      %s160 = ssub.s32 %s28, %s47
      %s161 = ssub.s32 %s29, %s43
      %s162 = sor.u32 %s160, %s161
      %p163 = scmp.eq.s32.totalorder %s162, 0
      %s165 = sadd.s32 %s164, 1
      %s166 = scalar_select %p163, %s164, %s165
      %p169 = pneg %p163
      %p170 = scmp.eq.s32.totalorder %s21, 3
      %p171 = por %p169, %p170
      %p172 = scmp.ne.s32.totalorder %s164, %s167
      %p173 = scmp.eq.s32.totalorder %s21, 0
      %p174 = por %p172, %p173
      %p175 = scmp.ne.s32.totalorder %s164, %s167
      %p176 = scmp.eq.s32.totalorder %s26, 3
      %p177 = por %p175, %p176
      %p178 = scmp.ne.s32.totalorder %s167, %s168
      %p179 = scmp.eq.s32.totalorder %s26, 0
      %p180 = por %p178, %p179
      %p181 = scmp.ne.s32.totalorder %s167, %s168
      %p182 = scmp.eq.s32.totalorder %s27, 3
      %p183 = por %p181, %p182
      %p185 = scmp.ne.s32.totalorder %s168, %s184
      %p186 = scmp.eq.s32.totalorder %s27, 0
      %p187 = por %p185, %p186
      %p188 = scmp.le.s32.totalorder 1, %s21
      %p189 = scmp.lt.s32.totalorder %s21, 5
      %p190 = pnand %p188, %p189
      %p191 = pneg %p190
      // Predicated region
      $region9: #{tpu_custom_call.1} parent=5 // pred_check
        _
      $region10: #{tpu_custom_call.1} parent=5 // pred_check_branch
        %193 = sbr.rel (%p190) target = $region12
      $region11: #{tpu_custom_call.1} parent=5 // pred_region
        %s194 = ssub.s32 %s21, 1
        // Predicated region
        $region13: #{tpu_custom_call.1} parent=11 // pred_check
          %p195 = pneg %p96
        $region14: #{tpu_custom_call.1} parent=11 // pred_check_branch
          %197 = sbr.rel (%p195) target = $region16
        $region15: #{tpu_custom_call.1} parent=11 // pred_region
          %s198 = smul.u32 32, %s33
          %s200 = ssub.s32 2048, 2048
          %201 = vsyncadd [#allocation7], %s200
          %s202 = sadd.s32 %s32, %s198
          %s203 = smul.addr %s202, 64
          %s204 = scalar_lea.hbm %s1, %s203
          %s205 = sshll.u32 [#allocation6], 4
          %s206 = int_to_ptr.vmem [resolvable:$true] %s205
          %211 = dma.hbm_to_vmem [thread:$0]  %s204, 2048, %s206, [#allocation7], 64, 64, 4
        $region16: #{tpu_custom_call.1} parent=11 // pred_fallthru
          _
      $region12: #{tpu_custom_call.1} parent=5 // pred_fallthru
        _
      %p212 = scmp.lt.s32.totalorder %s21, 4
      // Predicated region
      $region17: #{tpu_custom_call.1} parent=5 // pred_check
        %p213 = pneg %p212
      $region18: #{tpu_custom_call.1} parent=5 // pred_check_branch
        %215 = sbr.rel (%p213) target = $region20
      $region19: #{tpu_custom_call.1} parent=5 // pred_region
        // Predicated region
        $region21: #{tpu_custom_call.1} parent=19 // pred_check
          %p216 = pneg %p62
        $region22: #{tpu_custom_call.1} parent=19 // pred_check_branch
          %218 = sbr.rel (%p216) target = $region24
        $region23: #{tpu_custom_call.1} parent=19 // pred_region
          %s219 = sand.u32 %s52, 1
          %s220 = scalar_lea.sflag [#allocation4], %s219
          %s221 = sand.u32 %s52, 1
          %s222 = smul.addr %s221, 512
          %s223 = scalar_lea.vmem [#allocation3], %s222
          %s224 = smul.u32 64, %s28
          %s225 = smul.u32 2, %s30
          %s227 = ssub.s32 8192, 8192
          %228 = vsyncadd %s220, %s227
          %s229 = smul.addr %s224, 2
          %s230 = sadd.s32 %s225, %s229
          %s231 = smul.addr %s230, 64
          %s232 = scalar_lea.hbm %s0, %s231
          %s233 = sshll.u32 %s223, 4
          %s234 = int_to_ptr.vmem [resolvable:$true] %s233
          %239 = dma.hbm_to_vmem [thread:$0]  %s232, 8192, %s234, %s220, 128, 128, 8
        $region24: #{tpu_custom_call.1} parent=19 // pred_fallthru
          _
      $region20: #{tpu_custom_call.1} parent=5 // pred_fallthru
        _
      %p240 = scmp.le.s32.totalorder 1, %s21
      %p241 = scmp.lt.s32.totalorder %s21, 5
      %p242 = pnand %p240, %p241
      %p243 = pneg %p242
      // Predicated region
      $region25: #{tpu_custom_call.1} parent=5 // pred_check
        _
      $region26: #{tpu_custom_call.1} parent=5 // pred_check_branch
        %245 = sbr.rel (%p242) target = $region28
      $region27: #{tpu_custom_call.1} parent=5 // pred_region
        %s246 = ssub.s32 %s21, 1
        %s247 = sand.u32 %s55, 1
        %s248 = scalar_lea.sflag [#allocation4], %s247
        %s249 = sand.u32 %s55, 1
        %s250 = smul.addr %s249, 512
        %s251 = scalar_lea.vmem [#allocation3], %s250
        // Predicated region
        $region29: #{tpu_custom_call.1} parent=27 // pred_check
          %p252 = pneg %p68
        $region30: #{tpu_custom_call.1} parent=27 // pred_check_branch
          %254 = sbr.rel (%p252) target = $region32
        $region31: #{tpu_custom_call.1} parent=27 // pred_region
          %255 = dma.done %s248, 8192
        $region32: #{tpu_custom_call.1} parent=27 // pred_fallthru
          _
        // Predicated region
        $region33: #{tpu_custom_call.1} parent=27 // pred_check
          %p256 = pneg %p96
        $region34: #{tpu_custom_call.1} parent=27 // pred_check_branch
          %258 = sbr.rel (%p256) target = $region36
        $region35: #{tpu_custom_call.1} parent=27 // pred_region
          %259 = dma.done [#allocation7], 2048
        $region36: #{tpu_custom_call.1} parent=27 // pred_fallthru
          _
        %s260 = sand.u32 %s55, 1
        %s261 = scalar_lea.sflag [#allocation4], %s260
        %s262 = sand.u32 %s55, 1
        %s263 = smul.addr %s262, 512
        %s264 = scalar_lea.vmem [#allocation3], %s263
        %p265 = pneg %p68
        %p266 = pneg %p65
        %p267 = pneg %p96
        %p268 = pneg %p93
        %p269 = pneg %p124
        %p270 = pneg %p121
        %s271 = sand.u32 %s111, 1
        %s272 = scalar_lea.sflag [#allocation5], %s271
        %s273 = sand.u32 %s111, 1
        %s274 = smul.addr %s273, 256
        %s275 = scalar_lea.vmem [#allocation8], %s274
        %p276 = pneg %p152
        %p277 = pneg %p149
        %s278 = sand.u32 %s26, 1
        %s279 = scalar_lea.sflag [#allocation10], %s278
        %s280 = sand.u32 %s139, 1
        %s281 = smul.addr %s280, 8
        %s282 = scalar_lea.vmem [#allocation9], %s281
        %p283 = pneg %p180
        %p284 = pneg %p177
        %s285 = sand.u32 %s26, 1
        %s286 = scalar_lea.sflag [#allocation10], %s285
        %s287 = sand.u32 %s167, 1
        %s288 = smul.addr %s287, 8
        %s289 = scalar_lea.vmem [#allocation11], %s288
        %s290 = smul.u32 64, %s31
        %s291 = smul.u32 2, %s33
        %s292 = smul.u32 32, %s33
        %s293 = smul.u32 64, %s31
        %p295 = scmp.eq.s32.totalorder %s33, 0
        // Predicated region
        $region37: #{tpu_custom_call.1} parent=27 // pred_check
          %p296 = pneg %p295
        $region38: #{tpu_custom_call.1} parent=27 // pred_check_branch
          %298 = sbr.rel (%p296) target = $region40
        $region39: #{tpu_custom_call.1} parent=27 // pred_region
          %299 = vst [vmem:[#allocation2] sm:$0xff] 0.0
          %300 = vst [vmem:[#allocation2 + $0x8] sm:$0xff] 0.0
          %301 = vst [vmem:[#allocation2 + $0x10] sm:$0xff] 0.0
          %302 = vst [vmem:[#allocation2 + $0x18] sm:$0xff] 0.0
          %303 = vst [vmem:[#allocation2 + $0x20] sm:$0xff] 0.0
          %304 = vst [vmem:[#allocation2 + $0x28] sm:$0xff] 0.0
          %305 = vst [vmem:[#allocation2 + $0x30] sm:$0xff] 0.0
          %306 = vst [vmem:[#allocation2 + $0x38] sm:$0xff] 0.0
          %307 = vst [vmem:[#allocation2 + $0x40] sm:$0xff] 0.0
          %308 = vst [vmem:[#allocation2 + $0x48] sm:$0xff] 0.0
          %309 = vst [vmem:[#allocation2 + $0x50] sm:$0xff] 0.0
          %310 = vst [vmem:[#allocation2 + $0x58] sm:$0xff] 0.0
          %311 = vst [vmem:[#allocation2 + $0x60] sm:$0xff] 0.0
          %312 = vst [vmem:[#allocation2 + $0x68] sm:$0xff] 0.0
          %313 = vst [vmem:[#allocation2 + $0x70] sm:$0xff] 0.0
          %314 = vst [vmem:[#allocation2 + $0x78] sm:$0xff] 0.0
          %315 = vst [vmem:[#allocation2 + $0x80] sm:$0xff] 0.0
          %316 = vst [vmem:[#allocation2 + $0x88] sm:$0xff] 0.0
          %317 = vst [vmem:[#allocation2 + $0x90] sm:$0xff] 0.0
          %318 = vst [vmem:[#allocation2 + $0x98] sm:$0xff] 0.0
          %319 = vst [vmem:[#allocation2 + $0xa0] sm:$0xff] 0.0
          %320 = vst [vmem:[#allocation2 + $0xa8] sm:$0xff] 0.0
          %321 = vst [vmem:[#allocation2 + $0xb0] sm:$0xff] 0.0
          %322 = vst [vmem:[#allocation2 + $0xb8] sm:$0xff] 0.0
          %323 = vst [vmem:[#allocation2 + $0xc0] sm:$0xff] 0.0
          %324 = vst [vmem:[#allocation2 + $0xc8] sm:$0xff] 0.0
          %325 = vst [vmem:[#allocation2 + $0xd0] sm:$0xff] 0.0
          %326 = vst [vmem:[#allocation2 + $0xd8] sm:$0xff] 0.0
          %327 = vst [vmem:[#allocation2 + $0xe0] sm:$0xff] 0.0
          %328 = vst [vmem:[#allocation2 + $0xe8] sm:$0xff] 0.0
          %329 = vst [vmem:[#allocation2 + $0xf0] sm:$0xff] 0.0
          %330 = vst [vmem:[#allocation2 + $0xf8] sm:$0xff] 0.0
          %331 = vst [vmem:[#allocation2 + $0x100] sm:$0xff] 0.0
          %332 = vst [vmem:[#allocation2 + $0x108] sm:$0xff] 0.0
          %333 = vst [vmem:[#allocation2 + $0x110] sm:$0xff] 0.0
          %334 = vst [vmem:[#allocation2 + $0x118] sm:$0xff] 0.0
          %335 = vst [vmem:[#allocation2 + $0x120] sm:$0xff] 0.0
          %336 = vst [vmem:[#allocation2 + $0x128] sm:$0xff] 0.0
          %337 = vst [vmem:[#allocation2 + $0x130] sm:$0xff] 0.0
          %338 = vst [vmem:[#allocation2 + $0x138] sm:$0xff] 0.0
          %339 = vst [vmem:[#allocation2 + $0x140] sm:$0xff] 0.0
          %340 = vst [vmem:[#allocation2 + $0x148] sm:$0xff] 0.0
          %341 = vst [vmem:[#allocation2 + $0x150] sm:$0xff] 0.0
          %342 = vst [vmem:[#allocation2 + $0x158] sm:$0xff] 0.0
          %343 = vst [vmem:[#allocation2 + $0x160] sm:$0xff] 0.0
          %344 = vst [vmem:[#allocation2 + $0x168] sm:$0xff] 0.0
          %345 = vst [vmem:[#allocation2 + $0x170] sm:$0xff] 0.0
          %346 = vst [vmem:[#allocation2 + $0x178] sm:$0xff] 0.0
          %347 = vst [vmem:[#allocation2 + $0x180] sm:$0xff] 0.0
          %348 = vst [vmem:[#allocation2 + $0x188] sm:$0xff] 0.0
          %349 = vst [vmem:[#allocation2 + $0x190] sm:$0xff] 0.0
          %350 = vst [vmem:[#allocation2 + $0x198] sm:$0xff] 0.0
          %351 = vst [vmem:[#allocation2 + $0x1a0] sm:$0xff] 0.0
          %352 = vst [vmem:[#allocation2 + $0x1a8] sm:$0xff] 0.0
          %353 = vst [vmem:[#allocation2 + $0x1b0] sm:$0xff] 0.0
          %354 = vst [vmem:[#allocation2 + $0x1b8] sm:$0xff] 0.0
          %355 = vst [vmem:[#allocation2 + $0x1c0] sm:$0xff] 0.0
          %356 = vst [vmem:[#allocation2 + $0x1c8] sm:$0xff] 0.0
          %357 = vst [vmem:[#allocation2 + $0x1d0] sm:$0xff] 0.0
          %358 = vst [vmem:[#allocation2 + $0x1d8] sm:$0xff] 0.0
          %359 = vst [vmem:[#allocation2 + $0x1e0] sm:$0xff] 0.0
          %360 = vst [vmem:[#allocation2 + $0x1e8] sm:$0xff] 0.0
          %361 = vst [vmem:[#allocation2 + $0x1f0] sm:$0xff] 0.0
          %362 = vst [vmem:[#allocation2 + $0x1f8] sm:$0xff] 0.0
        $region40: #{tpu_custom_call.1} parent=27 // pred_fallthru
          _
        %v363 = vld [vmem:[#allocation2] sm:$0xff]
        %v364 = vld [vmem:[#allocation2 + $0x8] sm:$0xff]
        %v365 = vld [vmem:[#allocation2 + $0x10] sm:$0xff]
        %v366 = vld [vmem:[#allocation2 + $0x18] sm:$0xff]
        %v367 = vld [vmem:[#allocation2 + $0x20] sm:$0xff]
        %v368 = vld [vmem:[#allocation2 + $0x28] sm:$0xff]
        %v369 = vld [vmem:[#allocation2 + $0x30] sm:$0xff]
        %v370 = vld [vmem:[#allocation2 + $0x38] sm:$0xff]
        %v371 = vld [vmem:[#allocation2 + $0x40] sm:$0xff]
        %v372 = vld [vmem:[#allocation2 + $0x48] sm:$0xff]
        %v373 = vld [vmem:[#allocation2 + $0x50] sm:$0xff]
        %v374 = vld [vmem:[#allocation2 + $0x58] sm:$0xff]
        %v375 = vld [vmem:[#allocation2 + $0x60] sm:$0xff]
        %v376 = vld [vmem:[#allocation2 + $0x68] sm:$0xff]
        %v377 = vld [vmem:[#allocation2 + $0x70] sm:$0xff]
        %v378 = vld [vmem:[#allocation2 + $0x78] sm:$0xff]
        %v379 = vld [vmem:[#allocation2 + $0x80] sm:$0xff]
        %v380 = vld [vmem:[#allocation2 + $0x88] sm:$0xff]
        %v381 = vld [vmem:[#allocation2 + $0x90] sm:$0xff]
        %v382 = vld [vmem:[#allocation2 + $0x98] sm:$0xff]
        %v383 = vld [vmem:[#allocation2 + $0xa0] sm:$0xff]
        %v384 = vld [vmem:[#allocation2 + $0xa8] sm:$0xff]
        %v385 = vld [vmem:[#allocation2 + $0xb0] sm:$0xff]
        %v386 = vld [vmem:[#allocation2 + $0xb8] sm:$0xff]
        %v387 = vld [vmem:[#allocation2 + $0xc0] sm:$0xff]
        %v388 = vld [vmem:[#allocation2 + $0xc8] sm:$0xff]
        %v389 = vld [vmem:[#allocation2 + $0xd0] sm:$0xff]
        %v390 = vld [vmem:[#allocation2 + $0xd8] sm:$0xff]
        %v391 = vld [vmem:[#allocation2 + $0xe0] sm:$0xff]
        %v392 = vld [vmem:[#allocation2 + $0xe8] sm:$0xff]
        %v393 = vld [vmem:[#allocation2 + $0xf0] sm:$0xff]
        %v394 = vld [vmem:[#allocation2 + $0xf8] sm:$0xff]
        %v395 = vld [vmem:[#allocation2 + $0x100] sm:$0xff]
        %v396 = vld [vmem:[#allocation2 + $0x108] sm:$0xff]
        %v397 = vld [vmem:[#allocation2 + $0x110] sm:$0xff]
        %v398 = vld [vmem:[#allocation2 + $0x118] sm:$0xff]
        %v399 = vld [vmem:[#allocation2 + $0x120] sm:$0xff]
        %v400 = vld [vmem:[#allocation2 + $0x128] sm:$0xff]
        %v401 = vld [vmem:[#allocation2 + $0x130] sm:$0xff]
        %v402 = vld [vmem:[#allocation2 + $0x138] sm:$0xff]
        %v403 = vld [vmem:[#allocation2 + $0x140] sm:$0xff]
        %v404 = vld [vmem:[#allocation2 + $0x148] sm:$0xff]
        %v405 = vld [vmem:[#allocation2 + $0x150] sm:$0xff]
        %v406 = vld [vmem:[#allocation2 + $0x158] sm:$0xff]
        %v407 = vld [vmem:[#allocation2 + $0x160] sm:$0xff]
        %v408 = vld [vmem:[#allocation2 + $0x168] sm:$0xff]
        %v409 = vld [vmem:[#allocation2 + $0x170] sm:$0xff]
        %v410 = vld [vmem:[#allocation2 + $0x178] sm:$0xff]
        %v411 = vld [vmem:[#allocation2 + $0x180] sm:$0xff]
        %v412 = vld [vmem:[#allocation2 + $0x188] sm:$0xff]
        %v413 = vld [vmem:[#allocation2 + $0x190] sm:$0xff]
        %v414 = vld [vmem:[#allocation2 + $0x198] sm:$0xff]
        %v415 = vld [vmem:[#allocation2 + $0x1a0] sm:$0xff]
        %v416 = vld [vmem:[#allocation2 + $0x1a8] sm:$0xff]
        %v417 = vld [vmem:[#allocation2 + $0x1b0] sm:$0xff]
        %v418 = vld [vmem:[#allocation2 + $0x1b8] sm:$0xff]
        %v419 = vld [vmem:[#allocation2 + $0x1c0] sm:$0xff]
        %v420 = vld [vmem:[#allocation2 + $0x1c8] sm:$0xff]
        %v421 = vld [vmem:[#allocation2 + $0x1d0] sm:$0xff]
        %v422 = vld [vmem:[#allocation2 + $0x1d8] sm:$0xff]
        %v423 = vld [vmem:[#allocation2 + $0x1e0] sm:$0xff]
        %v424 = vld [vmem:[#allocation2 + $0x1e8] sm:$0xff]
        %v425 = vld [vmem:[#allocation2 + $0x1f0] sm:$0xff]
        %v426 = vld [vmem:[#allocation2 + $0x1f8] sm:$0xff]
        %v427 = vld [vmem:[%s251] sm:$0xff]
        %v428 = vld [vmem:[%s251 + $0x8] sm:$0xff]
        %v429 = vld [vmem:[%s251 + $0x10] sm:$0xff]
        %v430 = vld [vmem:[%s251 + $0x18] sm:$0xff]
        %v431 = vld [vmem:[%s251 + $0x20] sm:$0xff]
        %v432 = vld [vmem:[%s251 + $0x28] sm:$0xff]
        %v433 = vld [vmem:[%s251 + $0x30] sm:$0xff]
        %v434 = vld [vmem:[%s251 + $0x38] sm:$0xff]
        %v435 = vld [vmem:[%s251 + $0x40] sm:$0xff]
        %v436 = vld [vmem:[%s251 + $0x48] sm:$0xff]
        %v437 = vld [vmem:[%s251 + $0x50] sm:$0xff]
        %v438 = vld [vmem:[%s251 + $0x58] sm:$0xff]
        %v439 = vld [vmem:[%s251 + $0x60] sm:$0xff]
        %v440 = vld [vmem:[%s251 + $0x68] sm:$0xff]
        %v441 = vld [vmem:[%s251 + $0x70] sm:$0xff]
        %v442 = vld [vmem:[%s251 + $0x78] sm:$0xff]
        %v443 = vld [vmem:[%s251 + $0x80] sm:$0xff]
        %v444 = vld [vmem:[%s251 + $0x88] sm:$0xff]
        %v445 = vld [vmem:[%s251 + $0x90] sm:$0xff]
        %v446 = vld [vmem:[%s251 + $0x98] sm:$0xff]
        %v447 = vld [vmem:[%s251 + $0xa0] sm:$0xff]
        %v448 = vld [vmem:[%s251 + $0xa8] sm:$0xff]
        %v449 = vld [vmem:[%s251 + $0xb0] sm:$0xff]
        %v450 = vld [vmem:[%s251 + $0xb8] sm:$0xff]
        %v451 = vld [vmem:[%s251 + $0xc0] sm:$0xff]
        %v452 = vld [vmem:[%s251 + $0xc8] sm:$0xff]
        %v453 = vld [vmem:[%s251 + $0xd0] sm:$0xff]
        %v454 = vld [vmem:[%s251 + $0xd8] sm:$0xff]
        %v455 = vld [vmem:[%s251 + $0xe0] sm:$0xff]
        %v456 = vld [vmem:[%s251 + $0xe8] sm:$0xff]
        %v457 = vld [vmem:[%s251 + $0xf0] sm:$0xff]
        %v458 = vld [vmem:[%s251 + $0xf8] sm:$0xff]
        %v459 = vld [vmem:[%s251 + $0x100] sm:$0xff]
        %v460 = vld [vmem:[%s251 + $0x108] sm:$0xff]
        %v461 = vld [vmem:[%s251 + $0x110] sm:$0xff]
        %v462 = vld [vmem:[%s251 + $0x118] sm:$0xff]
        %v463 = vld [vmem:[%s251 + $0x120] sm:$0xff]
        %v464 = vld [vmem:[%s251 + $0x128] sm:$0xff]
        %v465 = vld [vmem:[%s251 + $0x130] sm:$0xff]
        %v466 = vld [vmem:[%s251 + $0x138] sm:$0xff]
        %v467 = vld [vmem:[%s251 + $0x140] sm:$0xff]
        %v468 = vld [vmem:[%s251 + $0x148] sm:$0xff]
        %v469 = vld [vmem:[%s251 + $0x150] sm:$0xff]
        %v470 = vld [vmem:[%s251 + $0x158] sm:$0xff]
        %v471 = vld [vmem:[%s251 + $0x160] sm:$0xff]
        %v472 = vld [vmem:[%s251 + $0x168] sm:$0xff]
        %v473 = vld [vmem:[%s251 + $0x170] sm:$0xff]
        %v474 = vld [vmem:[%s251 + $0x178] sm:$0xff]
        %v475 = vld [vmem:[%s251 + $0x180] sm:$0xff]
        %v476 = vld [vmem:[%s251 + $0x188] sm:$0xff]
        %v477 = vld [vmem:[%s251 + $0x190] sm:$0xff]
        %v478 = vld [vmem:[%s251 + $0x198] sm:$0xff]
        %v479 = vld [vmem:[%s251 + $0x1a0] sm:$0xff]
        %v480 = vld [vmem:[%s251 + $0x1a8] sm:$0xff]
        %v481 = vld [vmem:[%s251 + $0x1b0] sm:$0xff]
        %v482 = vld [vmem:[%s251 + $0x1b8] sm:$0xff]
        %v483 = vld [vmem:[%s251 + $0x1c0] sm:$0xff]
        %v484 = vld [vmem:[%s251 + $0x1c8] sm:$0xff]
        %v485 = vld [vmem:[%s251 + $0x1d0] sm:$0xff]
        %v486 = vld [vmem:[%s251 + $0x1d8] sm:$0xff]
        %v487 = vld [vmem:[%s251 + $0x1e0] sm:$0xff]
        %v488 = vld [vmem:[%s251 + $0x1e8] sm:$0xff]
        %v489 = vld [vmem:[%s251 + $0x1f0] sm:$0xff]
        %v490 = vld [vmem:[%s251 + $0x1f8] sm:$0xff]
        %v491 = vld [vmem:[#allocation6] sm:$0xf]
        %v492 = vld [vmem:[#allocation6 + $0x4] sm:$0xf]
        %v493 = vld [vmem:[#allocation6 + $0x8] sm:$0xf]
        %v494 = vld [vmem:[#allocation6 + $0xc] sm:$0xf]
        %v495 = vld [vmem:[#allocation6 + $0x10] sm:$0xf]
        %v496 = vld [vmem:[#allocation6 + $0x14] sm:$0xf]
        %v497 = vld [vmem:[#allocation6 + $0x18] sm:$0xf]
        %v498 = vld [vmem:[#allocation6 + $0x1c] sm:$0xf]
        %v499 = vld [vmem:[#allocation6 + $0x20] sm:$0xf]
        %v500 = vld [vmem:[#allocation6 + $0x24] sm:$0xf]
        %v501 = vld [vmem:[#allocation6 + $0x28] sm:$0xf]
        %v502 = vld [vmem:[#allocation6 + $0x2c] sm:$0xf]
        %v503 = vld [vmem:[#allocation6 + $0x30] sm:$0xf]
        %v504 = vld [vmem:[#allocation6 + $0x34] sm:$0xf]
        %v505 = vld [vmem:[#allocation6 + $0x38] sm:$0xf]
        %v506 = vld [vmem:[#allocation6 + $0x3c] sm:$0xf]
        %v507 = vld [vmem:[#allocation6 + $0x40] sm:$0xf]
        %v508 = vld [vmem:[#allocation6 + $0x44] sm:$0xf]
        %v509 = vld [vmem:[#allocation6 + $0x48] sm:$0xf]
        %v510 = vld [vmem:[#allocation6 + $0x4c] sm:$0xf]
        %v511 = vld [vmem:[#allocation6 + $0x50] sm:$0xf]
        %v512 = vld [vmem:[#allocation6 + $0x54] sm:$0xf]
        %v513 = vld [vmem:[#allocation6 + $0x58] sm:$0xf]
        %v514 = vld [vmem:[#allocation6 + $0x5c] sm:$0xf]
        %v515 = vld [vmem:[#allocation6 + $0x60] sm:$0xf]
        %v516 = vld [vmem:[#allocation6 + $0x64] sm:$0xf]
        %v517 = vld [vmem:[#allocation6 + $0x68] sm:$0xf]
        %v518 = vld [vmem:[#allocation6 + $0x6c] sm:$0xf]
        %v519 = vld [vmem:[#allocation6 + $0x70] sm:$0xf]
        %v520 = vld [vmem:[#allocation6 + $0x74] sm:$0xf]
        %v521 = vld [vmem:[#allocation6 + $0x78] sm:$0xf]
        %v522 = vld [vmem:[#allocation6 + $0x7c] sm:$0xf]
        %v587 = vunpack.c.l.b16 %v427
        %v588 = vunpack.c.h.b16 %v427
        %v589 = vunpack.c.l.b16 %v428
        %v590 = vunpack.c.h.b16 %v428
        %v591 = vunpack.c.l.b16 %v429
        %v592 = vunpack.c.h.b16 %v429
        %v593 = vunpack.c.l.b16 %v430
        %v594 = vunpack.c.h.b16 %v430
        %v595 = vunpack.c.l.b16 %v431
        %v596 = vunpack.c.h.b16 %v431
        %v597 = vunpack.c.l.b16 %v432
        %v598 = vunpack.c.h.b16 %v432
        %v599 = vunpack.c.l.b16 %v433
        %v600 = vunpack.c.h.b16 %v433
        %v601 = vunpack.c.l.b16 %v434
        %v602 = vunpack.c.h.b16 %v434
        %v603 = vunpack.c.l.b16 %v435
        %v604 = vunpack.c.h.b16 %v435
        %v605 = vunpack.c.l.b16 %v436
        %v606 = vunpack.c.h.b16 %v436
        %v607 = vunpack.c.l.b16 %v437
        %v608 = vunpack.c.h.b16 %v437
        %v609 = vunpack.c.l.b16 %v438
        %v610 = vunpack.c.h.b16 %v438
        %v611 = vunpack.c.l.b16 %v439
        %v612 = vunpack.c.h.b16 %v439
        %v613 = vunpack.c.l.b16 %v440
        %v614 = vunpack.c.h.b16 %v440
        %v615 = vunpack.c.l.b16 %v441
        %v616 = vunpack.c.h.b16 %v441
        %v617 = vunpack.c.l.b16 %v442
        %v618 = vunpack.c.h.b16 %v442
        %v619 = vunpack.c.l.b16 %v443
        %v620 = vunpack.c.h.b16 %v443
        %v621 = vunpack.c.l.b16 %v444
        %v622 = vunpack.c.h.b16 %v444
        %v623 = vunpack.c.l.b16 %v445
        %v624 = vunpack.c.h.b16 %v445
        %v625 = vunpack.c.l.b16 %v446
        %v626 = vunpack.c.h.b16 %v446
        %v627 = vunpack.c.l.b16 %v447
        %v628 = vunpack.c.h.b16 %v447
        %v629 = vunpack.c.l.b16 %v448
        %v630 = vunpack.c.h.b16 %v448
        %v631 = vunpack.c.l.b16 %v449
        %v632 = vunpack.c.h.b16 %v449
        %v633 = vunpack.c.l.b16 %v450
        %v634 = vunpack.c.h.b16 %v450
        %v635 = vunpack.c.l.b16 %v451
        %v636 = vunpack.c.h.b16 %v451
        %v637 = vunpack.c.l.b16 %v452
        %v638 = vunpack.c.h.b16 %v452
        %v639 = vunpack.c.l.b16 %v453
        %v640 = vunpack.c.h.b16 %v453
        %v641 = vunpack.c.l.b16 %v454
        %v642 = vunpack.c.h.b16 %v454
        %v643 = vunpack.c.l.b16 %v455
        %v644 = vunpack.c.h.b16 %v455
        %v645 = vunpack.c.l.b16 %v456
        %v646 = vunpack.c.h.b16 %v456
        %v647 = vunpack.c.l.b16 %v457
        %v648 = vunpack.c.h.b16 %v457
        %v649 = vunpack.c.l.b16 %v458
        %v650 = vunpack.c.h.b16 %v458
        %v651 = vunpack.c.l.b16 %v459
        %v652 = vunpack.c.h.b16 %v459
        %v653 = vunpack.c.l.b16 %v460
        %v654 = vunpack.c.h.b16 %v460
        %v655 = vunpack.c.l.b16 %v461
        %v656 = vunpack.c.h.b16 %v461
        %v657 = vunpack.c.l.b16 %v462
        %v658 = vunpack.c.h.b16 %v462
        %v659 = vunpack.c.l.b16 %v463
        %v660 = vunpack.c.h.b16 %v463
        %v661 = vunpack.c.l.b16 %v464
        %v662 = vunpack.c.h.b16 %v464
        %v663 = vunpack.c.l.b16 %v465
        %v664 = vunpack.c.h.b16 %v465
        %v665 = vunpack.c.l.b16 %v466
        %v666 = vunpack.c.h.b16 %v466
        %v667 = vunpack.c.l.b16 %v467
        %v668 = vunpack.c.h.b16 %v467
        %v669 = vunpack.c.l.b16 %v468
        %v670 = vunpack.c.h.b16 %v468
        %v671 = vunpack.c.l.b16 %v469
        %v672 = vunpack.c.h.b16 %v469
        %v673 = vunpack.c.l.b16 %v470
        %v674 = vunpack.c.h.b16 %v470
        %v675 = vunpack.c.l.b16 %v471
        %v676 = vunpack.c.h.b16 %v471
        %v677 = vunpack.c.l.b16 %v472
        %v678 = vunpack.c.h.b16 %v472
        %v679 = vunpack.c.l.b16 %v473
        %v680 = vunpack.c.h.b16 %v473
        %v681 = vunpack.c.l.b16 %v474
        %v682 = vunpack.c.h.b16 %v474
        %v683 = vunpack.c.l.b16 %v475
        %v684 = vunpack.c.h.b16 %v475
        %v685 = vunpack.c.l.b16 %v476
        %v686 = vunpack.c.h.b16 %v476
        %v687 = vunpack.c.l.b16 %v477
        %v688 = vunpack.c.h.b16 %v477
        %v689 = vunpack.c.l.b16 %v478
        %v690 = vunpack.c.h.b16 %v478
        %v691 = vunpack.c.l.b16 %v479
        %v692 = vunpack.c.h.b16 %v479
        %v693 = vunpack.c.l.b16 %v480
        %v694 = vunpack.c.h.b16 %v480
        %v695 = vunpack.c.l.b16 %v481
        %v696 = vunpack.c.h.b16 %v481
        %v697 = vunpack.c.l.b16 %v482
        %v698 = vunpack.c.h.b16 %v482
        %v699 = vunpack.c.l.b16 %v483
        %v700 = vunpack.c.h.b16 %v483
        %v701 = vunpack.c.l.b16 %v484
        %v702 = vunpack.c.h.b16 %v484
        %v703 = vunpack.c.l.b16 %v485
        %v704 = vunpack.c.h.b16 %v485
        %v705 = vunpack.c.l.b16 %v486
        %v706 = vunpack.c.h.b16 %v486
        %v707 = vunpack.c.l.b16 %v487
        %v708 = vunpack.c.h.b16 %v487
        %v709 = vunpack.c.l.b16 %v488
        %v710 = vunpack.c.h.b16 %v488
        %v711 = vunpack.c.l.b16 %v489
        %v712 = vunpack.c.h.b16 %v489
        %v713 = vunpack.c.l.b16 %v490
        %v714 = vunpack.c.h.b16 %v490
        %v715 = vpack.c.b16 %v589, %v587
        %v716 = vpack.c.b16 %v590, %v588
        %v717 = vpack.c.b16 %v593, %v591
        %v718 = vpack.c.b16 %v594, %v592
        %v719 = vpack.c.b16 %v597, %v595
        %v720 = vpack.c.b16 %v598, %v596
        %v721 = vpack.c.b16 %v601, %v599
        %v722 = vpack.c.b16 %v602, %v600
        %v723 = vpack.c.b16 %v605, %v603
        %v724 = vpack.c.b16 %v606, %v604
        %v725 = vpack.c.b16 %v609, %v607
        %v726 = vpack.c.b16 %v610, %v608
        %v727 = vpack.c.b16 %v613, %v611
        %v728 = vpack.c.b16 %v614, %v612
        %v729 = vpack.c.b16 %v617, %v615
        %v730 = vpack.c.b16 %v618, %v616
        %v731 = vpack.c.b16 %v621, %v619
        %v732 = vpack.c.b16 %v622, %v620
        %v733 = vpack.c.b16 %v625, %v623
        %v734 = vpack.c.b16 %v626, %v624
        %v735 = vpack.c.b16 %v629, %v627
        %v736 = vpack.c.b16 %v630, %v628
        %v737 = vpack.c.b16 %v633, %v631
        %v738 = vpack.c.b16 %v634, %v632
        %v739 = vpack.c.b16 %v637, %v635
        %v740 = vpack.c.b16 %v638, %v636
        %v741 = vpack.c.b16 %v641, %v639
        %v742 = vpack.c.b16 %v642, %v640
        %v743 = vpack.c.b16 %v645, %v643
        %v744 = vpack.c.b16 %v646, %v644
        %v745 = vpack.c.b16 %v649, %v647
        %v746 = vpack.c.b16 %v650, %v648
        %v747 = vpack.c.b16 %v653, %v651
        %v748 = vpack.c.b16 %v654, %v652
        %v749 = vpack.c.b16 %v657, %v655
        %v750 = vpack.c.b16 %v658, %v656
        %v751 = vpack.c.b16 %v661, %v659
        %v752 = vpack.c.b16 %v662, %v660
        %v753 = vpack.c.b16 %v665, %v663
        %v754 = vpack.c.b16 %v666, %v664
        %v755 = vpack.c.b16 %v669, %v667
        %v756 = vpack.c.b16 %v670, %v668
        %v757 = vpack.c.b16 %v673, %v671
        %v758 = vpack.c.b16 %v674, %v672
        %v759 = vpack.c.b16 %v677, %v675
        %v760 = vpack.c.b16 %v678, %v676
        %v761 = vpack.c.b16 %v681, %v679
        %v762 = vpack.c.b16 %v682, %v680
        %v763 = vpack.c.b16 %v685, %v683
        %v764 = vpack.c.b16 %v686, %v684
        %v765 = vpack.c.b16 %v689, %v687
        %v766 = vpack.c.b16 %v690, %v688
        %v767 = vpack.c.b16 %v693, %v691
        %v768 = vpack.c.b16 %v694, %v692
        %v769 = vpack.c.b16 %v697, %v695
        %v770 = vpack.c.b16 %v698, %v696
        %v771 = vpack.c.b16 %v701, %v699
        %v772 = vpack.c.b16 %v702, %v700
        %v773 = vpack.c.b16 %v705, %v703
        %v774 = vpack.c.b16 %v706, %v704
        %v775 = vpack.c.b16 %v709, %v707
        %v776 = vpack.c.b16 %v710, %v708
        %v777 = vpack.c.b16 %v713, %v711
        %v778 = vpack.c.b16 %v714, %v712
        %v875 = vunpack.c.l.b16 %v491
        %v876 = vunpack.c.l.b16 %v492
        %v877 = vunpack.c.l.b16 %v493
        %v878 = vunpack.c.l.b16 %v494
        %v879 = vunpack.c.l.b16 %v495
        %v880 = vunpack.c.l.b16 %v496
        %v881 = vunpack.c.l.b16 %v497
        %v882 = vunpack.c.l.b16 %v498
        %v883 = vunpack.c.l.b16 %v499
        %v884 = vunpack.c.l.b16 %v500
        %v885 = vunpack.c.l.b16 %v501
        %v886 = vunpack.c.l.b16 %v502
        %v887 = vunpack.c.l.b16 %v503
        %v888 = vunpack.c.l.b16 %v504
        %v889 = vunpack.c.l.b16 %v505
        %v890 = vunpack.c.l.b16 %v506
        %v891 = vunpack.c.l.b16 %v507
        %v892 = vunpack.c.l.b16 %v508
        %v893 = vunpack.c.l.b16 %v509
        %v894 = vunpack.c.l.b16 %v510
        %v895 = vunpack.c.l.b16 %v511
        %v896 = vunpack.c.l.b16 %v512
        %v897 = vunpack.c.l.b16 %v513
        %v898 = vunpack.c.l.b16 %v514
        %v899 = vunpack.c.l.b16 %v515
        %v900 = vunpack.c.l.b16 %v516
        %v901 = vunpack.c.l.b16 %v517
        %v902 = vunpack.c.l.b16 %v518
        %v903 = vunpack.c.l.b16 %v519
        %v904 = vunpack.c.l.b16 %v520
        %v905 = vunpack.c.l.b16 %v521
        %v906 = vunpack.c.l.b16 %v522
        %v907 = vpack.c.b16 %v876, %v875
        %v908 = vpack.c.b16 %v878, %v877
        %v909 = vpack.c.b16 %v880, %v879
        %v910 = vpack.c.b16 %v882, %v881
        %v911 = vpack.c.b16 %v884, %v883
        %v912 = vpack.c.b16 %v886, %v885
        %v913 = vpack.c.b16 %v888, %v887
        %v914 = vpack.c.b16 %v890, %v889
        %v915 = vpack.c.b16 %v892, %v891
        %v916 = vpack.c.b16 %v894, %v893
        %v917 = vpack.c.b16 %v896, %v895
        %v918 = vpack.c.b16 %v898, %v897
        %v919 = vpack.c.b16 %v900, %v899
        %v920 = vpack.c.b16 %v902, %v901
        %v921 = vpack.c.b16 %v904, %v903
        %v922 = vpack.c.b16 %v906, %v905
        %939 = vmatprep.subr.bf16.mxu0 0
        %940 = vmatpush1.bf16.msra.mxu0 %v907
        %941 = vmatprep.subr.bf16.mxu0 0
        %942 = vmatpush1.bf16.msra.mxu0 %v908
        %943 = vmatprep.subr.bf16.mxu0 0
        %944 = vmatpush1.bf16.msra.mxu0 %v909
        %945 = vmatprep.subr.bf16.mxu0 0
        %946 = vmatpush1.bf16.msra.mxu0 %v910
        %947 = vmatprep.subr.bf16.mxu0 0
        %948 = vmatpush1.bf16.msra.mxu0 %v911
        %949 = vmatprep.subr.bf16.mxu0 0
        %950 = vmatpush1.bf16.msra.mxu0 %v912
        %951 = vmatprep.subr.bf16.mxu0 0
        %952 = vmatpush1.bf16.msra.mxu0 %v913
        %953 = vmatprep.subr.bf16.mxu0 0
        %954 = vmatpush1.bf16.msra.mxu0 %v914
        %955 = vmatprep.subr.bf16.mxu0 0
        %956 = vmatpush1.bf16.msra.mxu0 %v915
        %957 = vmatprep.subr.bf16.mxu0 0
        %958 = vmatpush1.bf16.msra.mxu0 %v916
        %959 = vmatprep.subr.bf16.mxu0 0
        %960 = vmatpush1.bf16.msra.mxu0 %v917
        %961 = vmatprep.subr.bf16.mxu0 0
        %962 = vmatpush1.bf16.msra.mxu0 %v918
        %963 = vmatprep.subr.bf16.mxu0 0
        %964 = vmatpush1.bf16.msra.mxu0 %v919
        %965 = vmatprep.subr.bf16.mxu0 0
        %966 = vmatpush1.bf16.msra.mxu0 %v920
        %967 = vmatprep.subr.bf16.mxu0 0
        %968 = vmatpush1.bf16.msra.mxu0 %v921
        %969 = vmatprep.subr.bf16.mxu0 0
        %970 = vmatpush1.bf16.msra.mxu0 %v922
        %971 = vmatprep.mubr.bf16.mxu0 %v716
        %972 = vmatmul.mubr.bf16.gmra.mrb[0].mxu0 %v715
        %v973 = vpop.f32.mrb[0].mxu0
        %v974 = vadd.f32 0.0, %v973
        %v975 = vpop.f32.mrb[0].mxu0
        %v976 = vpop.f32.mrb[0].mxu0
        %v977 = vadd.f32 0.0, %v976
        %v978 = vpop.f32.mrb[0].mxu0
        %979 = vmatprep.mubr.bf16.mxu0 %v718
        %980 = vmatmul.mubr.bf16.gmra.mrb[0].mxu0 %v717
        %v981 = vpop.f32.mrb[0].mxu0
        %v982 = vadd.f32 0.0, %v981
        %v983 = vpop.f32.mrb[0].mxu0
        %v984 = vpop.f32.mrb[0].mxu0
        %v985 = vadd.f32 0.0, %v984
        %v986 = vpop.f32.mrb[0].mxu0
        %987 = vmatprep.mubr.bf16.mxu0 %v720
        %988 = vmatmul.mubr.bf16.gmra.mrb[0].mxu0 %v719
        %v989 = vpop.f32.mrb[0].mxu0
        %v990 = vadd.f32 0.0, %v989
        %v991 = vpop.f32.mrb[0].mxu0
        %v992 = vpop.f32.mrb[0].mxu0
        %v993 = vadd.f32 0.0, %v992
        %v994 = vpop.f32.mrb[0].mxu0
        %995 = vmatprep.mubr.bf16.mxu0 %v722
        %996 = vmatmul.mubr.bf16.gmra.mrb[0].mxu0 %v721
        %v997 = vpop.f32.mrb[0].mxu0
        %v998 = vadd.f32 0.0, %v997
        %v999 = vpop.f32.mrb[0].mxu0
        %v1000 = vpop.f32.mrb[0].mxu0
        %v1001 = vadd.f32 0.0, %v1000
        %v1002 = vpop.f32.mrb[0].mxu0
        %1003 = vmatprep.mubr.bf16.mxu0 %v724
        %1004 = vmatmul.mubr.bf16.gmra.mrb[0].mxu0 %v723
        %v1005 = vpop.f32.mrb[0].mxu0
        %v1006 = vadd.f32 0.0, %v1005
        %v1007 = vpop.f32.mrb[0].mxu0
        %v1008 = vpop.f32.mrb[0].mxu0
        %v1009 = vadd.f32 0.0, %v1008
        %v1010 = vpop.f32.mrb[0].mxu0
        %1011 = vmatprep.mubr.bf16.mxu0 %v726
        %1012 = vmatmul.mubr.bf16.gmra.mrb[0].mxu0 %v725
        %v1013 = vpop.f32.mrb[0].mxu0
        %v1014 = vadd.f32 0.0, %v1013
        %v1015 = vpop.f32.mrb[0].mxu0
        %v1016 = vpop.f32.mrb[0].mxu0
        %v1017 = vadd.f32 0.0, %v1016
        %v1018 = vpop.f32.mrb[0].mxu0
        %1019 = vmatprep.mubr.bf16.mxu0 %v728
        %1020 = vmatmul.mubr.bf16.gmra.mrb[0].mxu0 %v727
        %v1021 = vpop.f32.mrb[0].mxu0
        %v1022 = vadd.f32 0.0, %v1021
        %v1023 = vpop.f32.mrb[0].mxu0
        %v1024 = vpop.f32.mrb[0].mxu0
        %v1025 = vadd.f32 0.0, %v1024
        %v1026 = vpop.f32.mrb[0].mxu0
        %1027 = vmatprep.mubr.bf16.mxu0 %v730
        %1028 = vmatmul.mubr.bf16.gmra.mrb[0].mxu0 %v729
        %v1029 = vpop.f32.mrb[0].mxu0
        %v1030 = vadd.f32 0.0, %v1029
        %v1031 = vpop.f32.mrb[0].mxu0
        %v1032 = vpop.f32.mrb[0].mxu0
        %v1033 = vadd.f32 0.0, %v1032
        %v1034 = vpop.f32.mrb[0].mxu0
        %1035 = vmatprep.mubr.bf16.mxu0 %v732
        %1036 = vmatmul.mubr.bf16.gmra.mrb[0].mxu0 %v731
        %v1037 = vpop.f32.mrb[0].mxu0
        %v1038 = vadd.f32 0.0, %v1037
        %v1039 = vpop.f32.mrb[0].mxu0
        %v1040 = vpop.f32.mrb[0].mxu0
        %v1041 = vadd.f32 0.0, %v1040
        %v1042 = vpop.f32.mrb[0].mxu0
        %1043 = vmatprep.mubr.bf16.mxu0 %v734
        %1044 = vmatmul.mubr.bf16.gmra.mrb[0].mxu0 %v733
        %v1045 = vpop.f32.mrb[0].mxu0
        %v1046 = vadd.f32 0.0, %v1045
        %v1047 = vpop.f32.mrb[0].mxu0
        %v1048 = vpop.f32.mrb[0].mxu0
        %v1049 = vadd.f32 0.0, %v1048
        %v1050 = vpop.f32.mrb[0].mxu0
        %1051 = vmatprep.mubr.bf16.mxu0 %v736
        %1052 = vmatmul.mubr.bf16.gmra.mrb[0].mxu0 %v735
        %v1053 = vpop.f32.mrb[0].mxu0
        %v1054 = vadd.f32 0.0, %v1053
        %v1055 = vpop.f32.mrb[0].mxu0
        %v1056 = vpop.f32.mrb[0].mxu0
        %v1057 = vadd.f32 0.0, %v1056
        %v1058 = vpop.f32.mrb[0].mxu0
        %1059 = vmatprep.mubr.bf16.mxu0 %v738
        %1060 = vmatmul.mubr.bf16.gmra.mrb[0].mxu0 %v737
        %v1061 = vpop.f32.mrb[0].mxu0
        %v1062 = vadd.f32 0.0, %v1061
        %v1063 = vpop.f32.mrb[0].mxu0
        %v1064 = vpop.f32.mrb[0].mxu0
        %v1065 = vadd.f32 0.0, %v1064
        %v1066 = vpop.f32.mrb[0].mxu0
        %1067 = vmatprep.mubr.bf16.mxu0 %v740
        %1068 = vmatmul.mubr.bf16.gmra.mrb[0].mxu0 %v739
        %v1069 = vpop.f32.mrb[0].mxu0
        %v1070 = vadd.f32 0.0, %v1069
        %v1071 = vpop.f32.mrb[0].mxu0
        %v1072 = vpop.f32.mrb[0].mxu0
        %v1073 = vadd.f32 0.0, %v1072
        %v1074 = vpop.f32.mrb[0].mxu0
        %1075 = vmatprep.mubr.bf16.mxu0 %v742
        %1076 = vmatmul.mubr.bf16.gmra.mrb[0].mxu0 %v741
        %v1077 = vpop.f32.mrb[0].mxu0
        %v1078 = vadd.f32 0.0, %v1077
        %v1079 = vpop.f32.mrb[0].mxu0
        %v1080 = vpop.f32.mrb[0].mxu0
        %v1081 = vadd.f32 0.0, %v1080
        %v1082 = vpop.f32.mrb[0].mxu0
        %1083 = vmatprep.mubr.bf16.mxu0 %v744
        %1084 = vmatmul.mubr.bf16.gmra.mrb[0].mxu0 %v743
        %v1085 = vpop.f32.mrb[0].mxu0
        %v1086 = vadd.f32 0.0, %v1085
        %v1087 = vpop.f32.mrb[0].mxu0
        %v1088 = vpop.f32.mrb[0].mxu0
        %v1089 = vadd.f32 0.0, %v1088
        %v1090 = vpop.f32.mrb[0].mxu0
        %1091 = vmatprep.mubr.bf16.mxu0 %v746
        %1092 = vmatmul.mubr.bf16.gmra.mrb[0].mxu0 %v745
        %v1093 = vpop.f32.mrb[0].mxu0
        %v1094 = vadd.f32 0.0, %v1093
        %v1095 = vpop.f32.mrb[0].mxu0
        %v1096 = vpop.f32.mrb[0].mxu0
        %v1097 = vadd.f32 0.0, %v1096
        %v1098 = vpop.f32.mrb[0].mxu0
        %1099 = vmatprep.mubr.bf16.mxu0 %v748
        %1100 = vmatmul.mubr.bf16.gmra.mrb[0].mxu0 %v747
        %v1101 = vpop.f32.mrb[0].mxu0
        %v1102 = vadd.f32 0.0, %v1101
        %v1103 = vpop.f32.mrb[0].mxu0
        %v1104 = vpop.f32.mrb[0].mxu0
        %v1105 = vadd.f32 0.0, %v1104
        %v1106 = vpop.f32.mrb[0].mxu0
        %1107 = vmatprep.mubr.bf16.mxu0 %v750
        %1108 = vmatmul.mubr.bf16.gmra.mrb[0].mxu0 %v749
        %v1109 = vpop.f32.mrb[0].mxu0
        %v1110 = vadd.f32 0.0, %v1109
        %v1111 = vpop.f32.mrb[0].mxu0
        %v1112 = vpop.f32.mrb[0].mxu0
        %v1113 = vadd.f32 0.0, %v1112
        %v1114 = vpop.f32.mrb[0].mxu0
        %1115 = vmatprep.mubr.bf16.mxu0 %v752
        %1116 = vmatmul.mubr.bf16.gmra.mrb[0].mxu0 %v751
        %v1117 = vpop.f32.mrb[0].mxu0
        %v1118 = vadd.f32 0.0, %v1117
        %v1119 = vpop.f32.mrb[0].mxu0
        %v1120 = vpop.f32.mrb[0].mxu0
        %v1121 = vadd.f32 0.0, %v1120
        %v1122 = vpop.f32.mrb[0].mxu0
        %1123 = vmatprep.mubr.bf16.mxu0 %v754
        %1124 = vmatmul.mubr.bf16.gmra.mrb[0].mxu0 %v753
        %v1125 = vpop.f32.mrb[0].mxu0
        %v1126 = vadd.f32 0.0, %v1125
        %v1127 = vpop.f32.mrb[0].mxu0
        %v1128 = vpop.f32.mrb[0].mxu0
        %v1129 = vadd.f32 0.0, %v1128
        %v1130 = vpop.f32.mrb[0].mxu0
        %1131 = vmatprep.mubr.bf16.mxu0 %v756
        %1132 = vmatmul.mubr.bf16.gmra.mrb[0].mxu0 %v755
        %v1133 = vpop.f32.mrb[0].mxu0
        %v1134 = vadd.f32 0.0, %v1133
        %v1135 = vpop.f32.mrb[0].mxu0
        %v1136 = vpop.f32.mrb[0].mxu0
        %v1137 = vadd.f32 0.0, %v1136
        %v1138 = vpop.f32.mrb[0].mxu0
        %1139 = vmatprep.mubr.bf16.mxu0 %v758
        %1140 = vmatmul.mubr.bf16.gmra.mrb[0].mxu0 %v757
        %v1141 = vpop.f32.mrb[0].mxu0
        %v1142 = vadd.f32 0.0, %v1141
        %v1143 = vpop.f32.mrb[0].mxu0
        %v1144 = vpop.f32.mrb[0].mxu0
        %v1145 = vadd.f32 0.0, %v1144
        %v1146 = vpop.f32.mrb[0].mxu0
        %1147 = vmatprep.mubr.bf16.mxu0 %v760
        %1148 = vmatmul.mubr.bf16.gmra.mrb[0].mxu0 %v759
        %v1149 = vpop.f32.mrb[0].mxu0
        %v1150 = vadd.f32 0.0, %v1149
        %v1151 = vpop.f32.mrb[0].mxu0
        %v1152 = vpop.f32.mrb[0].mxu0
        %v1153 = vadd.f32 0.0, %v1152
        %v1154 = vpop.f32.mrb[0].mxu0
        %1155 = vmatprep.mubr.bf16.mxu0 %v762
        %1156 = vmatmul.mubr.bf16.gmra.mrb[0].mxu0 %v761
        %v1157 = vpop.f32.mrb[0].mxu0
        %v1158 = vadd.f32 0.0, %v1157
        %v1159 = vpop.f32.mrb[0].mxu0
        %v1160 = vpop.f32.mrb[0].mxu0
        %v1161 = vadd.f32 0.0, %v1160
        %v1162 = vpop.f32.mrb[0].mxu0
        %1163 = vmatprep.mubr.bf16.mxu0 %v764
        %1164 = vmatmul.mubr.bf16.gmra.mrb[0].mxu0 %v763
        %v1165 = vpop.f32.mrb[0].mxu0
        %v1166 = vadd.f32 0.0, %v1165
        %v1167 = vpop.f32.mrb[0].mxu0
        %v1168 = vpop.f32.mrb[0].mxu0
        %v1169 = vadd.f32 0.0, %v1168
        %v1170 = vpop.f32.mrb[0].mxu0
        %1171 = vmatprep.mubr.bf16.mxu0 %v766
        %1172 = vmatmul.mubr.bf16.gmra.mrb[0].mxu0 %v765
        %v1173 = vpop.f32.mrb[0].mxu0
        %v1174 = vadd.f32 0.0, %v1173
        %v1175 = vpop.f32.mrb[0].mxu0
        %v1176 = vpop.f32.mrb[0].mxu0
        %v1177 = vadd.f32 0.0, %v1176
        %v1178 = vpop.f32.mrb[0].mxu0
        %1179 = vmatprep.mubr.bf16.mxu0 %v768
        %1180 = vmatmul.mubr.bf16.gmra.mrb[0].mxu0 %v767
        %v1181 = vpop.f32.mrb[0].mxu0
        %v1182 = vadd.f32 0.0, %v1181
        %v1183 = vpop.f32.mrb[0].mxu0
        %v1184 = vpop.f32.mrb[0].mxu0
        %v1185 = vadd.f32 0.0, %v1184
        %v1186 = vpop.f32.mrb[0].mxu0
        %1187 = vmatprep.mubr.bf16.mxu0 %v770
        %1188 = vmatmul.mubr.bf16.gmra.mrb[0].mxu0 %v769
        %v1189 = vpop.f32.mrb[0].mxu0
        %v1190 = vadd.f32 0.0, %v1189
        %v1191 = vpop.f32.mrb[0].mxu0
        %v1192 = vpop.f32.mrb[0].mxu0
        %v1193 = vadd.f32 0.0, %v1192
        %v1194 = vpop.f32.mrb[0].mxu0
        %1195 = vmatprep.mubr.bf16.mxu0 %v772
        %1196 = vmatmul.mubr.bf16.gmra.mrb[0].mxu0 %v771
        %v1197 = vpop.f32.mrb[0].mxu0
        %v1198 = vadd.f32 0.0, %v1197
        %v1199 = vpop.f32.mrb[0].mxu0
        %v1200 = vpop.f32.mrb[0].mxu0
        %v1201 = vadd.f32 0.0, %v1200
        %v1202 = vpop.f32.mrb[0].mxu0
        %1203 = vmatprep.mubr.bf16.mxu0 %v774
        %1204 = vmatmul.mubr.bf16.gmra.mrb[0].mxu0 %v773
        %v1205 = vpop.f32.mrb[0].mxu0
        %v1206 = vadd.f32 0.0, %v1205
        %v1207 = vpop.f32.mrb[0].mxu0
        %v1208 = vpop.f32.mrb[0].mxu0
        %v1209 = vadd.f32 0.0, %v1208
        %v1210 = vpop.f32.mrb[0].mxu0
        %1211 = vmatprep.mubr.bf16.mxu0 %v776
        %1212 = vmatmul.mubr.bf16.gmra.mrb[0].mxu0 %v775
        %v1213 = vpop.f32.mrb[0].mxu0
        %v1214 = vadd.f32 0.0, %v1213
        %v1215 = vpop.f32.mrb[0].mxu0
        %v1216 = vpop.f32.mrb[0].mxu0
        %v1217 = vadd.f32 0.0, %v1216
        %v1218 = vpop.f32.mrb[0].mxu0
        %1219 = vmatprep.mubr.bf16.mxu0 %v778
        %1220 = vmatmul.mubr.bf16.gmra.mrb[0].mxu0 %v777
        %v1221 = vpop.f32.mrb[0].mxu0
        %v1222 = vadd.f32 0.0, %v1221
        %v1223 = vpop.f32.mrb[0].mxu0
        %v1224 = vpop.f32.mrb[0].mxu0
        %v1225 = vadd.f32 0.0, %v1224
        %v1226 = vpop.f32.mrb[0].mxu0
        %1227 = vdwg.mxu0
        %v1228 = vadd.f32 %v363, %v974
        %v1229 = vadd.f32 %v364, %v977
        %v1230 = vadd.f32 %v365, %v982
        %v1231 = vadd.f32 %v366, %v985
        %v1232 = vadd.f32 %v367, %v990
        %v1233 = vadd.f32 %v368, %v993
        %v1234 = vadd.f32 %v369, %v998
        %v1235 = vadd.f32 %v370, %v1001
        %v1236 = vadd.f32 %v371, %v1006
        %v1237 = vadd.f32 %v372, %v1009
        %v1238 = vadd.f32 %v373, %v1014
        %v1239 = vadd.f32 %v374, %v1017
        %v1240 = vadd.f32 %v375, %v1022
        %v1241 = vadd.f32 %v376, %v1025
        %v1242 = vadd.f32 %v377, %v1030
        %v1243 = vadd.f32 %v378, %v1033
        %v1244 = vadd.f32 %v379, %v1038
        %v1245 = vadd.f32 %v380, %v1041
        %v1246 = vadd.f32 %v381, %v1046
        %v1247 = vadd.f32 %v382, %v1049
        %v1248 = vadd.f32 %v383, %v1054
        %v1249 = vadd.f32 %v384, %v1057
        %v1250 = vadd.f32 %v385, %v1062
        %v1251 = vadd.f32 %v386, %v1065
        %v1252 = vadd.f32 %v387, %v1070
        %v1253 = vadd.f32 %v388, %v1073
        %v1254 = vadd.f32 %v389, %v1078
        %v1255 = vadd.f32 %v390, %v1081
        %v1256 = vadd.f32 %v391, %v1086
        %v1257 = vadd.f32 %v392, %v1089
        %v1258 = vadd.f32 %v393, %v1094
        %v1259 = vadd.f32 %v394, %v1097
        %v1260 = vadd.f32 %v395, %v1102
        %v1261 = vadd.f32 %v396, %v1105
        %v1262 = vadd.f32 %v397, %v1110
        %v1263 = vadd.f32 %v398, %v1113
        %v1264 = vadd.f32 %v399, %v1118
        %v1265 = vadd.f32 %v400, %v1121
        %v1266 = vadd.f32 %v401, %v1126
        %v1267 = vadd.f32 %v402, %v1129
        %v1268 = vadd.f32 %v403, %v1134
        %v1269 = vadd.f32 %v404, %v1137
        %v1270 = vadd.f32 %v405, %v1142
        %v1271 = vadd.f32 %v406, %v1145
        %v1272 = vadd.f32 %v407, %v1150
        %v1273 = vadd.f32 %v408, %v1153
        %v1274 = vadd.f32 %v409, %v1158
        %v1275 = vadd.f32 %v410, %v1161
        %v1276 = vadd.f32 %v411, %v1166
        %v1277 = vadd.f32 %v412, %v1169
        %v1278 = vadd.f32 %v413, %v1174
        %v1279 = vadd.f32 %v414, %v1177
        %v1280 = vadd.f32 %v415, %v1182
        %v1281 = vadd.f32 %v416, %v1185
        %v1282 = vadd.f32 %v417, %v1190
        %v1283 = vadd.f32 %v418, %v1193
        %v1284 = vadd.f32 %v419, %v1198
        %v1285 = vadd.f32 %v420, %v1201
        %v1286 = vadd.f32 %v421, %v1206
        %v1287 = vadd.f32 %v422, %v1209
        %v1288 = vadd.f32 %v423, %v1214
        %v1289 = vadd.f32 %v424, %v1217
        %v1290 = vadd.f32 %v425, %v1222
        %v1291 = vadd.f32 %v426, %v1225
        %1292 = vst [vmem:[#allocation2] sm:$0xff] %v1228
        %1293 = vst [vmem:[#allocation2 + $0x8] sm:$0xff] %v1229
        %1294 = vst [vmem:[#allocation2 + $0x10] sm:$0xff] %v1230
        %1295 = vst [vmem:[#allocation2 + $0x18] sm:$0xff] %v1231
        %1296 = vst [vmem:[#allocation2 + $0x20] sm:$0xff] %v1232
        %1297 = vst [vmem:[#allocation2 + $0x28] sm:$0xff] %v1233
        %1298 = vst [vmem:[#allocation2 + $0x30] sm:$0xff] %v1234
        %1299 = vst [vmem:[#allocation2 + $0x38] sm:$0xff] %v1235
        %1300 = vst [vmem:[#allocation2 + $0x40] sm:$0xff] %v1236
        %1301 = vst [vmem:[#allocation2 + $0x48] sm:$0xff] %v1237
        %1302 = vst [vmem:[#allocation2 + $0x50] sm:$0xff] %v1238
        %1303 = vst [vmem:[#allocation2 + $0x58] sm:$0xff] %v1239
        %1304 = vst [vmem:[#allocation2 + $0x60] sm:$0xff] %v1240
        %1305 = vst [vmem:[#allocation2 + $0x68] sm:$0xff] %v1241
        %1306 = vst [vmem:[#allocation2 + $0x70] sm:$0xff] %v1242
        %1307 = vst [vmem:[#allocation2 + $0x78] sm:$0xff] %v1243
        %1308 = vst [vmem:[#allocation2 + $0x80] sm:$0xff] %v1244
        %1309 = vst [vmem:[#allocation2 + $0x88] sm:$0xff] %v1245
        %1310 = vst [vmem:[#allocation2 + $0x90] sm:$0xff] %v1246
        %1311 = vst [vmem:[#allocation2 + $0x98] sm:$0xff] %v1247
        %1312 = vst [vmem:[#allocation2 + $0xa0] sm:$0xff] %v1248
        %1313 = vst [vmem:[#allocation2 + $0xa8] sm:$0xff] %v1249
        %1314 = vst [vmem:[#allocation2 + $0xb0] sm:$0xff] %v1250
        %1315 = vst [vmem:[#allocation2 + $0xb8] sm:$0xff] %v1251
        %1316 = vst [vmem:[#allocation2 + $0xc0] sm:$0xff] %v1252
        %1317 = vst [vmem:[#allocation2 + $0xc8] sm:$0xff] %v1253
        %1318 = vst [vmem:[#allocation2 + $0xd0] sm:$0xff] %v1254
        %1319 = vst [vmem:[#allocation2 + $0xd8] sm:$0xff] %v1255
        %1320 = vst [vmem:[#allocation2 + $0xe0] sm:$0xff] %v1256
        %1321 = vst [vmem:[#allocation2 + $0xe8] sm:$0xff] %v1257
        %1322 = vst [vmem:[#allocation2 + $0xf0] sm:$0xff] %v1258
        %1323 = vst [vmem:[#allocation2 + $0xf8] sm:$0xff] %v1259
        %1324 = vst [vmem:[#allocation2 + $0x100] sm:$0xff] %v1260
        %1325 = vst [vmem:[#allocation2 + $0x108] sm:$0xff] %v1261
        %1326 = vst [vmem:[#allocation2 + $0x110] sm:$0xff] %v1262
        %1327 = vst [vmem:[#allocation2 + $0x118] sm:$0xff] %v1263
        %1328 = vst [vmem:[#allocation2 + $0x120] sm:$0xff] %v1264
        %1329 = vst [vmem:[#allocation2 + $0x128] sm:$0xff] %v1265
        %1330 = vst [vmem:[#allocation2 + $0x130] sm:$0xff] %v1266
        %1331 = vst [vmem:[#allocation2 + $0x138] sm:$0xff] %v1267
        %1332 = vst [vmem:[#allocation2 + $0x140] sm:$0xff] %v1268
        %1333 = vst [vmem:[#allocation2 + $0x148] sm:$0xff] %v1269
        %1334 = vst [vmem:[#allocation2 + $0x150] sm:$0xff] %v1270
        %1335 = vst [vmem:[#allocation2 + $0x158] sm:$0xff] %v1271
        %1336 = vst [vmem:[#allocation2 + $0x160] sm:$0xff] %v1272
        %1337 = vst [vmem:[#allocation2 + $0x168] sm:$0xff] %v1273
        %1338 = vst [vmem:[#allocation2 + $0x170] sm:$0xff] %v1274
        %1339 = vst [vmem:[#allocation2 + $0x178] sm:$0xff] %v1275
        %1340 = vst [vmem:[#allocation2 + $0x180] sm:$0xff] %v1276
        %1341 = vst [vmem:[#allocation2 + $0x188] sm:$0xff] %v1277
        %1342 = vst [vmem:[#allocation2 + $0x190] sm:$0xff] %v1278
        %1343 = vst [vmem:[#allocation2 + $0x198] sm:$0xff] %v1279
        %1344 = vst [vmem:[#allocation2 + $0x1a0] sm:$0xff] %v1280
        %1345 = vst [vmem:[#allocation2 + $0x1a8] sm:$0xff] %v1281
        %1346 = vst [vmem:[#allocation2 + $0x1b0] sm:$0xff] %v1282
        %1347 = vst [vmem:[#allocation2 + $0x1b8] sm:$0xff] %v1283
        %1348 = vst [vmem:[#allocation2 + $0x1c0] sm:$0xff] %v1284
        %1349 = vst [vmem:[#allocation2 + $0x1c8] sm:$0xff] %v1285
        %1350 = vst [vmem:[#allocation2 + $0x1d0] sm:$0xff] %v1286
        %1351 = vst [vmem:[#allocation2 + $0x1d8] sm:$0xff] %v1287
        %1352 = vst [vmem:[#allocation2 + $0x1e0] sm:$0xff] %v1288
        %1353 = vst [vmem:[#allocation2 + $0x1e8] sm:$0xff] %v1289
        %1354 = vst [vmem:[#allocation2 + $0x1f0] sm:$0xff] %v1290
        %1355 = vst [vmem:[#allocation2 + $0x1f8] sm:$0xff] %v1291
        // Predicated region
        $region41: #{tpu_custom_call.1} parent=27 // pred_check
          %p1356 = pneg %p295
        $region42: #{tpu_custom_call.1} parent=27 // pred_check_branch
          %1358 = sbr.rel (%p1356) target = $region44
        $region43: #{tpu_custom_call.1} parent=27 // pred_region
          %v1359 = vld [vmem:[#allocation2] sm:$0xff]
          %v1360 = vld [vmem:[#allocation2 + $0x8] sm:$0xff]
          %v1361 = vld [vmem:[#allocation2 + $0x10] sm:$0xff]
          %v1362 = vld [vmem:[#allocation2 + $0x18] sm:$0xff]
          %v1363 = vld [vmem:[#allocation2 + $0x20] sm:$0xff]
          %v1364 = vld [vmem:[#allocation2 + $0x28] sm:$0xff]
          %v1365 = vld [vmem:[#allocation2 + $0x30] sm:$0xff]
          %v1366 = vld [vmem:[#allocation2 + $0x38] sm:$0xff]
          %v1367 = vld [vmem:[#allocation2 + $0x40] sm:$0xff]
          %v1368 = vld [vmem:[#allocation2 + $0x48] sm:$0xff]
          %v1369 = vld [vmem:[#allocation2 + $0x50] sm:$0xff]
          %v1370 = vld [vmem:[#allocation2 + $0x58] sm:$0xff]
          %v1371 = vld [vmem:[#allocation2 + $0x60] sm:$0xff]
          %v1372 = vld [vmem:[#allocation2 + $0x68] sm:$0xff]
          %v1373 = vld [vmem:[#allocation2 + $0x70] sm:$0xff]
          %v1374 = vld [vmem:[#allocation2 + $0x78] sm:$0xff]
          %v1375 = vld [vmem:[#allocation2 + $0x80] sm:$0xff]
          %v1376 = vld [vmem:[#allocation2 + $0x88] sm:$0xff]
          %v1377 = vld [vmem:[#allocation2 + $0x90] sm:$0xff]
          %v1378 = vld [vmem:[#allocation2 + $0x98] sm:$0xff]
          %v1379 = vld [vmem:[#allocation2 + $0xa0] sm:$0xff]
          %v1380 = vld [vmem:[#allocation2 + $0xa8] sm:$0xff]
          %v1381 = vld [vmem:[#allocation2 + $0xb0] sm:$0xff]
          %v1382 = vld [vmem:[#allocation2 + $0xb8] sm:$0xff]
          %v1383 = vld [vmem:[#allocation2 + $0xc0] sm:$0xff]
          %v1384 = vld [vmem:[#allocation2 + $0xc8] sm:$0xff]
          %v1385 = vld [vmem:[#allocation2 + $0xd0] sm:$0xff]
          %v1386 = vld [vmem:[#allocation2 + $0xd8] sm:$0xff]
          %v1387 = vld [vmem:[#allocation2 + $0xe0] sm:$0xff]
          %v1388 = vld [vmem:[#allocation2 + $0xe8] sm:$0xff]
          %v1389 = vld [vmem:[#allocation2 + $0xf0] sm:$0xff]
          %v1390 = vld [vmem:[#allocation2 + $0xf8] sm:$0xff]
          %v1391 = vld [vmem:[#allocation2 + $0x100] sm:$0xff]
          %v1392 = vld [vmem:[#allocation2 + $0x108] sm:$0xff]
          %v1393 = vld [vmem:[#allocation2 + $0x110] sm:$0xff]
          %v1394 = vld [vmem:[#allocation2 + $0x118] sm:$0xff]
          %v1395 = vld [vmem:[#allocation2 + $0x120] sm:$0xff]
          %v1396 = vld [vmem:[#allocation2 + $0x128] sm:$0xff]
          %v1397 = vld [vmem:[#allocation2 + $0x130] sm:$0xff]
          %v1398 = vld [vmem:[#allocation2 + $0x138] sm:$0xff]
          %v1399 = vld [vmem:[#allocation2 + $0x140] sm:$0xff]
          %v1400 = vld [vmem:[#allocation2 + $0x148] sm:$0xff]
          %v1401 = vld [vmem:[#allocation2 + $0x150] sm:$0xff]
          %v1402 = vld [vmem:[#allocation2 + $0x158] sm:$0xff]
          %v1403 = vld [vmem:[#allocation2 + $0x160] sm:$0xff]
          %v1404 = vld [vmem:[#allocation2 + $0x168] sm:$0xff]
          %v1405 = vld [vmem:[#allocation2 + $0x170] sm:$0xff]
          %v1406 = vld [vmem:[#allocation2 + $0x178] sm:$0xff]
          %v1407 = vld [vmem:[#allocation2 + $0x180] sm:$0xff]
          %v1408 = vld [vmem:[#allocation2 + $0x188] sm:$0xff]
          %v1409 = vld [vmem:[#allocation2 + $0x190] sm:$0xff]
          %v1410 = vld [vmem:[#allocation2 + $0x198] sm:$0xff]
          %v1411 = vld [vmem:[#allocation2 + $0x1a0] sm:$0xff]
          %v1412 = vld [vmem:[#allocation2 + $0x1a8] sm:$0xff]
          %v1413 = vld [vmem:[#allocation2 + $0x1b0] sm:$0xff]
          %v1414 = vld [vmem:[#allocation2 + $0x1b8] sm:$0xff]
          %v1415 = vld [vmem:[#allocation2 + $0x1c0] sm:$0xff]
          %v1416 = vld [vmem:[#allocation2 + $0x1c8] sm:$0xff]
          %v1417 = vld [vmem:[#allocation2 + $0x1d0] sm:$0xff]
          %v1418 = vld [vmem:[#allocation2 + $0x1d8] sm:$0xff]
          %v1419 = vld [vmem:[#allocation2 + $0x1e0] sm:$0xff]
          %v1420 = vld [vmem:[#allocation2 + $0x1e8] sm:$0xff]
          %v1421 = vld [vmem:[#allocation2 + $0x1f0] sm:$0xff]
          %v1422 = vld [vmem:[#allocation2 + $0x1f8] sm:$0xff]
          %v1423 = vpack.c.bf16 %v1360, %v1359
          %v1424 = vpack.c.bf16 %v1362, %v1361
          %v1425 = vpack.c.bf16 %v1364, %v1363
          %v1426 = vpack.c.bf16 %v1366, %v1365
          %v1427 = vpack.c.bf16 %v1368, %v1367
          %v1428 = vpack.c.bf16 %v1370, %v1369
          %v1429 = vpack.c.bf16 %v1372, %v1371
          %v1430 = vpack.c.bf16 %v1374, %v1373
          %v1431 = vpack.c.bf16 %v1376, %v1375
          %v1432 = vpack.c.bf16 %v1378, %v1377
          %v1433 = vpack.c.bf16 %v1380, %v1379
          %v1434 = vpack.c.bf16 %v1382, %v1381
          %v1435 = vpack.c.bf16 %v1384, %v1383
          %v1436 = vpack.c.bf16 %v1386, %v1385
          %v1437 = vpack.c.bf16 %v1388, %v1387
          %v1438 = vpack.c.bf16 %v1390, %v1389
          %v1439 = vpack.c.bf16 %v1392, %v1391
          %v1440 = vpack.c.bf16 %v1394, %v1393
          %v1441 = vpack.c.bf16 %v1396, %v1395
          %v1442 = vpack.c.bf16 %v1398, %v1397
          %v1443 = vpack.c.bf16 %v1400, %v1399
          %v1444 = vpack.c.bf16 %v1402, %v1401
          %v1445 = vpack.c.bf16 %v1404, %v1403
          %v1446 = vpack.c.bf16 %v1406, %v1405
          %v1447 = vpack.c.bf16 %v1408, %v1407
          %v1448 = vpack.c.bf16 %v1410, %v1409
          %v1449 = vpack.c.bf16 %v1412, %v1411
          %v1450 = vpack.c.bf16 %v1414, %v1413
          %v1451 = vpack.c.bf16 %v1416, %v1415
          %v1452 = vpack.c.bf16 %v1418, %v1417
          %v1453 = vpack.c.bf16 %v1420, %v1419
          %v1454 = vpack.c.bf16 %v1422, %v1421
          %v1487 = vunpack.c.l.b16 %v1423
          %v1488 = vunpack.c.h.b16 %v1423
          %v1489 = vunpack.c.l.b16 %v1424
          %v1490 = vunpack.c.h.b16 %v1424
          %v1491 = vunpack.c.l.b16 %v1425
          %v1492 = vunpack.c.h.b16 %v1425
          %v1493 = vunpack.c.l.b16 %v1426
          %v1494 = vunpack.c.h.b16 %v1426
          %v1495 = vunpack.c.l.b16 %v1427
          %v1496 = vunpack.c.h.b16 %v1427
          %v1497 = vunpack.c.l.b16 %v1428
          %v1498 = vunpack.c.h.b16 %v1428
          %v1499 = vunpack.c.l.b16 %v1429
          %v1500 = vunpack.c.h.b16 %v1429
          %v1501 = vunpack.c.l.b16 %v1430
          %v1502 = vunpack.c.h.b16 %v1430
          %v1503 = vunpack.c.l.b16 %v1431
          %v1504 = vunpack.c.h.b16 %v1431
          %v1505 = vunpack.c.l.b16 %v1432
          %v1506 = vunpack.c.h.b16 %v1432
          %v1507 = vunpack.c.l.b16 %v1433
          %v1508 = vunpack.c.h.b16 %v1433
          %v1509 = vunpack.c.l.b16 %v1434
          %v1510 = vunpack.c.h.b16 %v1434
          %v1511 = vunpack.c.l.b16 %v1435
          %v1512 = vunpack.c.h.b16 %v1435
          %v1513 = vunpack.c.l.b16 %v1436
          %v1514 = vunpack.c.h.b16 %v1436
          %v1515 = vunpack.c.l.b16 %v1437
          %v1516 = vunpack.c.h.b16 %v1437
          %v1517 = vunpack.c.l.b16 %v1438
          %v1518 = vunpack.c.h.b16 %v1438
          %v1519 = vunpack.c.l.b16 %v1439
          %v1520 = vunpack.c.h.b16 %v1439
          %v1521 = vunpack.c.l.b16 %v1440
          %v1522 = vunpack.c.h.b16 %v1440
          %v1523 = vunpack.c.l.b16 %v1441
          %v1524 = vunpack.c.h.b16 %v1441
          %v1525 = vunpack.c.l.b16 %v1442
          %v1526 = vunpack.c.h.b16 %v1442
          %v1527 = vunpack.c.l.b16 %v1443
          %v1528 = vunpack.c.h.b16 %v1443
          %v1529 = vunpack.c.l.b16 %v1444
          %v1530 = vunpack.c.h.b16 %v1444
          %v1531 = vunpack.c.l.b16 %v1445
          %v1532 = vunpack.c.h.b16 %v1445
          %v1533 = vunpack.c.l.b16 %v1446
          %v1534 = vunpack.c.h.b16 %v1446
          %v1535 = vunpack.c.l.b16 %v1447
          %v1536 = vunpack.c.h.b16 %v1447
          %v1537 = vunpack.c.l.b16 %v1448
          %v1538 = vunpack.c.h.b16 %v1448
          %v1539 = vunpack.c.l.b16 %v1449
          %v1540 = vunpack.c.h.b16 %v1449
          %v1541 = vunpack.c.l.b16 %v1450
          %v1542 = vunpack.c.h.b16 %v1450
          %v1543 = vunpack.c.l.b16 %v1451
          %v1544 = vunpack.c.h.b16 %v1451
          %v1545 = vunpack.c.l.b16 %v1452
          %v1546 = vunpack.c.h.b16 %v1452
          %v1547 = vunpack.c.l.b16 %v1453
          %v1548 = vunpack.c.h.b16 %v1453
          %v1549 = vunpack.c.l.b16 %v1454
          %v1550 = vunpack.c.h.b16 %v1454
          %v1551 = vpack.c.b16 %v1487, %v1487
          %v1552 = vpack.c.b16 %v1488, %v1488
          %v1553 = vpack.c.b16 %v1489, %v1489
          %v1554 = vpack.c.b16 %v1490, %v1490
          %v1555 = vpack.c.b16 %v1491, %v1491
          %v1556 = vpack.c.b16 %v1492, %v1492
          %v1557 = vpack.c.b16 %v1493, %v1493
          %v1558 = vpack.c.b16 %v1494, %v1494
          %v1559 = vpack.c.b16 %v1495, %v1495
          %v1560 = vpack.c.b16 %v1496, %v1496
          %v1561 = vpack.c.b16 %v1497, %v1497
          %v1562 = vpack.c.b16 %v1498, %v1498
          %v1563 = vpack.c.b16 %v1499, %v1499
          %v1564 = vpack.c.b16 %v1500, %v1500
          %v1565 = vpack.c.b16 %v1501, %v1501
          %v1566 = vpack.c.b16 %v1502, %v1502
          %v1567 = vpack.c.b16 %v1503, %v1503
          %v1568 = vpack.c.b16 %v1504, %v1504
          %v1569 = vpack.c.b16 %v1505, %v1505
          %v1570 = vpack.c.b16 %v1506, %v1506
          %v1571 = vpack.c.b16 %v1507, %v1507
          %v1572 = vpack.c.b16 %v1508, %v1508
          %v1573 = vpack.c.b16 %v1509, %v1509
          %v1574 = vpack.c.b16 %v1510, %v1510
          %v1575 = vpack.c.b16 %v1511, %v1511
          %v1576 = vpack.c.b16 %v1512, %v1512
          %v1577 = vpack.c.b16 %v1513, %v1513
          %v1578 = vpack.c.b16 %v1514, %v1514
          %v1579 = vpack.c.b16 %v1515, %v1515
          %v1580 = vpack.c.b16 %v1516, %v1516
          %v1581 = vpack.c.b16 %v1517, %v1517
          %v1582 = vpack.c.b16 %v1518, %v1518
          %v1583 = vpack.c.b16 %v1519, %v1519
          %v1584 = vpack.c.b16 %v1520, %v1520
          %v1585 = vpack.c.b16 %v1521, %v1521
          %v1586 = vpack.c.b16 %v1522, %v1522
          %v1587 = vpack.c.b16 %v1523, %v1523
          %v1588 = vpack.c.b16 %v1524, %v1524
          %v1589 = vpack.c.b16 %v1525, %v1525
          %v1590 = vpack.c.b16 %v1526, %v1526
          %v1591 = vpack.c.b16 %v1527, %v1527
          %v1592 = vpack.c.b16 %v1528, %v1528
          %v1593 = vpack.c.b16 %v1529, %v1529
          %v1594 = vpack.c.b16 %v1530, %v1530
          %v1595 = vpack.c.b16 %v1531, %v1531
          %v1596 = vpack.c.b16 %v1532, %v1532
          %v1597 = vpack.c.b16 %v1533, %v1533
          %v1598 = vpack.c.b16 %v1534, %v1534
          %v1599 = vpack.c.b16 %v1535, %v1535
          %v1600 = vpack.c.b16 %v1536, %v1536
          %v1601 = vpack.c.b16 %v1537, %v1537
          %v1602 = vpack.c.b16 %v1538, %v1538
          %v1603 = vpack.c.b16 %v1539, %v1539
          %v1604 = vpack.c.b16 %v1540, %v1540
          %v1605 = vpack.c.b16 %v1541, %v1541
          %v1606 = vpack.c.b16 %v1542, %v1542
          %v1607 = vpack.c.b16 %v1543, %v1543
          %v1608 = vpack.c.b16 %v1544, %v1544
          %v1609 = vpack.c.b16 %v1545, %v1545
          %v1610 = vpack.c.b16 %v1546, %v1546
          %v1611 = vpack.c.b16 %v1547, %v1547
          %v1612 = vpack.c.b16 %v1548, %v1548
          %v1613 = vpack.c.b16 %v1549, %v1549
          %v1614 = vpack.c.b16 %v1550, %v1550
          %1679 = vst [vmem:[%s275] sm:$0xf] %v1551
          %1680 = vst [vmem:[%s275 + $0x4] sm:$0xf] %v1552
          %1681 = vst [vmem:[%s275 + $0x8] sm:$0xf] %v1553
          %1682 = vst [vmem:[%s275 + $0xc] sm:$0xf] %v1554
          %1683 = vst [vmem:[%s275 + $0x10] sm:$0xf] %v1555
          %1684 = vst [vmem:[%s275 + $0x14] sm:$0xf] %v1556
          %1685 = vst [vmem:[%s275 + $0x18] sm:$0xf] %v1557
          %1686 = vst [vmem:[%s275 + $0x1c] sm:$0xf] %v1558
          %1687 = vst [vmem:[%s275 + $0x20] sm:$0xf] %v1559
          %1688 = vst [vmem:[%s275 + $0x24] sm:$0xf] %v1560
          %1689 = vst [vmem:[%s275 + $0x28] sm:$0xf] %v1561
          %1690 = vst [vmem:[%s275 + $0x2c] sm:$0xf] %v1562
          %1691 = vst [vmem:[%s275 + $0x30] sm:$0xf] %v1563
          %1692 = vst [vmem:[%s275 + $0x34] sm:$0xf] %v1564
          %1693 = vst [vmem:[%s275 + $0x38] sm:$0xf] %v1565
          %1694 = vst [vmem:[%s275 + $0x3c] sm:$0xf] %v1566
          %1695 = vst [vmem:[%s275 + $0x40] sm:$0xf] %v1567
          %1696 = vst [vmem:[%s275 + $0x44] sm:$0xf] %v1568
          %1697 = vst [vmem:[%s275 + $0x48] sm:$0xf] %v1569
          %1698 = vst [vmem:[%s275 + $0x4c] sm:$0xf] %v1570
          %1699 = vst [vmem:[%s275 + $0x50] sm:$0xf] %v1571
          %1700 = vst [vmem:[%s275 + $0x54] sm:$0xf] %v1572
          %1701 = vst [vmem:[%s275 + $0x58] sm:$0xf] %v1573
          %1702 = vst [vmem:[%s275 + $0x5c] sm:$0xf] %v1574
          %1703 = vst [vmem:[%s275 + $0x60] sm:$0xf] %v1575
          %1704 = vst [vmem:[%s275 + $0x64] sm:$0xf] %v1576
          %1705 = vst [vmem:[%s275 + $0x68] sm:$0xf] %v1577
          %1706 = vst [vmem:[%s275 + $0x6c] sm:$0xf] %v1578
          %1707 = vst [vmem:[%s275 + $0x70] sm:$0xf] %v1579
          %1708 = vst [vmem:[%s275 + $0x74] sm:$0xf] %v1580
          %1709 = vst [vmem:[%s275 + $0x78] sm:$0xf] %v1581
          %1710 = vst [vmem:[%s275 + $0x7c] sm:$0xf] %v1582
          %1711 = vst [vmem:[%s275 + $0x80] sm:$0xf] %v1583
          %1712 = vst [vmem:[%s275 + $0x84] sm:$0xf] %v1584
          %1713 = vst [vmem:[%s275 + $0x88] sm:$0xf] %v1585
          %1714 = vst [vmem:[%s275 + $0x8c] sm:$0xf] %v1586
          %1715 = vst [vmem:[%s275 + $0x90] sm:$0xf] %v1587
          %1716 = vst [vmem:[%s275 + $0x94] sm:$0xf] %v1588
          %1717 = vst [vmem:[%s275 + $0x98] sm:$0xf] %v1589
          %1718 = vst [vmem:[%s275 + $0x9c] sm:$0xf] %v1590
          %1719 = vst [vmem:[%s275 + $0xa0] sm:$0xf] %v1591
          %1720 = vst [vmem:[%s275 + $0xa4] sm:$0xf] %v1592
          %1721 = vst [vmem:[%s275 + $0xa8] sm:$0xf] %v1593
          %1722 = vst [vmem:[%s275 + $0xac] sm:$0xf] %v1594
          %1723 = vst [vmem:[%s275 + $0xb0] sm:$0xf] %v1595
          %1724 = vst [vmem:[%s275 + $0xb4] sm:$0xf] %v1596
          %1725 = vst [vmem:[%s275 + $0xb8] sm:$0xf] %v1597
          %1726 = vst [vmem:[%s275 + $0xbc] sm:$0xf] %v1598
          %1727 = vst [vmem:[%s275 + $0xc0] sm:$0xf] %v1599
          %1728 = vst [vmem:[%s275 + $0xc4] sm:$0xf] %v1600
          %1729 = vst [vmem:[%s275 + $0xc8] sm:$0xf] %v1601
          %1730 = vst [vmem:[%s275 + $0xcc] sm:$0xf] %v1602
          %1731 = vst [vmem:[%s275 + $0xd0] sm:$0xf] %v1603
          %1732 = vst [vmem:[%s275 + $0xd4] sm:$0xf] %v1604
          %1733 = vst [vmem:[%s275 + $0xd8] sm:$0xf] %v1605
          %1734 = vst [vmem:[%s275 + $0xdc] sm:$0xf] %v1606
          %1735 = vst [vmem:[%s275 + $0xe0] sm:$0xf] %v1607
          %1736 = vst [vmem:[%s275 + $0xe4] sm:$0xf] %v1608
          %1737 = vst [vmem:[%s275 + $0xe8] sm:$0xf] %v1609
          %1738 = vst [vmem:[%s275 + $0xec] sm:$0xf] %v1610
          %1739 = vst [vmem:[%s275 + $0xf0] sm:$0xf] %v1611
          %1740 = vst [vmem:[%s275 + $0xf4] sm:$0xf] %v1612
          %1741 = vst [vmem:[%s275 + $0xf8] sm:$0xf] %v1613
          %1742 = vst [vmem:[%s275 + $0xfc] sm:$0xf] %v1614
          %v1743 = vadd.f32 %v1359, %v1360
          %v1744 = vadd.f32 %v1743, %v1361
          %v1745 = vadd.f32 %v1744, %v1362
          %v1746 = vadd.f32 %v1745, %v1363
          %v1747 = vadd.f32 %v1746, %v1364
          %v1748 = vadd.f32 %v1747, %v1365
          %v1749 = vadd.f32 %v1748, %v1366
          %v1750 = vadd.f32 %v1749, %v1367
          %v1751 = vadd.f32 %v1750, %v1368
          %v1752 = vadd.f32 %v1751, %v1369
          %v1753 = vadd.f32 %v1752, %v1370
          %v1754 = vadd.f32 %v1753, %v1371
          %v1755 = vadd.f32 %v1754, %v1372
          %v1756 = vadd.f32 %v1755, %v1373
          %v1757 = vadd.f32 %v1756, %v1374
          %v1758 = vadd.f32 %v1757, %v1375
          %v1759 = vadd.f32 %v1758, %v1376
          %v1760 = vadd.f32 %v1759, %v1377
          %v1761 = vadd.f32 %v1760, %v1378
          %v1762 = vadd.f32 %v1761, %v1379
          %v1763 = vadd.f32 %v1762, %v1380
          %v1764 = vadd.f32 %v1763, %v1381
          %v1765 = vadd.f32 %v1764, %v1382
          %v1766 = vadd.f32 %v1765, %v1383
          %v1767 = vadd.f32 %v1766, %v1384
          %v1768 = vadd.f32 %v1767, %v1385
          %v1769 = vadd.f32 %v1768, %v1386
          %v1770 = vadd.f32 %v1769, %v1387
          %v1771 = vadd.f32 %v1770, %v1388
          %v1772 = vadd.f32 %v1771, %v1389
          %v1773 = vadd.f32 %v1772, %v1390
          %v1774 = vadd.f32 %v1773, %v1391
          %v1775 = vadd.f32 %v1774, %v1392
          %v1776 = vadd.f32 %v1775, %v1393
          %v1777 = vadd.f32 %v1776, %v1394
          %v1778 = vadd.f32 %v1777, %v1395
          %v1779 = vadd.f32 %v1778, %v1396
          %v1780 = vadd.f32 %v1779, %v1397
          %v1781 = vadd.f32 %v1780, %v1398
          %v1782 = vadd.f32 %v1781, %v1399
          %v1783 = vadd.f32 %v1782, %v1400
          %v1784 = vadd.f32 %v1783, %v1401
          %v1785 = vadd.f32 %v1784, %v1402
          %v1786 = vadd.f32 %v1785, %v1403
          %v1787 = vadd.f32 %v1786, %v1404
          %v1788 = vadd.f32 %v1787, %v1405
          %v1789 = vadd.f32 %v1788, %v1406
          %v1790 = vadd.f32 %v1789, %v1407
          %v1791 = vadd.f32 %v1790, %v1408
          %v1792 = vadd.f32 %v1791, %v1409
          %v1793 = vadd.f32 %v1792, %v1410
          %v1794 = vadd.f32 %v1793, %v1411
          %v1795 = vadd.f32 %v1794, %v1412
          %v1796 = vadd.f32 %v1795, %v1413
          %v1797 = vadd.f32 %v1796, %v1414
          %v1798 = vadd.f32 %v1797, %v1415
          %v1799 = vadd.f32 %v1798, %v1416
          %v1800 = vadd.f32 %v1799, %v1417
          %v1801 = vadd.f32 %v1800, %v1418
          %v1802 = vadd.f32 %v1801, %v1419
          %v1803 = vadd.f32 %v1802, %v1420
          %v1804 = vadd.f32 %v1803, %v1421
          %v1805 = vadd.f32 %v1804, %v1422
          %v1806 = vrot.slane %v1805, 4
          %v1807 = vadd.f32 %v1805, %v1806
          %v1808 = vrot.slane %v1807, 2
          %v1809 = vadd.f32 %v1807, %v1808
          %v1810 = vrot.slane %v1809, 1
          %v1811 = vadd.f32 %v1809, %v1810
          %1812 = vst [vmem:[%s282] sm:$0xff] %v1811
          %v1813 = vmul.f32 %v1359, %v1359
          %v1814 = vmul.f32 %v1360, %v1360
          %v1815 = vmul.f32 %v1361, %v1361
          %v1816 = vmul.f32 %v1362, %v1362
          %v1817 = vmul.f32 %v1363, %v1363
          %v1818 = vmul.f32 %v1364, %v1364
          %v1819 = vmul.f32 %v1365, %v1365
          %v1820 = vmul.f32 %v1366, %v1366
          %v1821 = vmul.f32 %v1367, %v1367
          %v1822 = vmul.f32 %v1368, %v1368
          %v1823 = vmul.f32 %v1369, %v1369
          %v1824 = vmul.f32 %v1370, %v1370
          %v1825 = vmul.f32 %v1371, %v1371
          %v1826 = vmul.f32 %v1372, %v1372
          %v1827 = vmul.f32 %v1373, %v1373
          %v1828 = vmul.f32 %v1374, %v1374
          %v1829 = vmul.f32 %v1375, %v1375
          %v1830 = vmul.f32 %v1376, %v1376
          %v1831 = vmul.f32 %v1377, %v1377
          %v1832 = vmul.f32 %v1378, %v1378
          %v1833 = vmul.f32 %v1379, %v1379
          %v1834 = vmul.f32 %v1380, %v1380
          %v1835 = vmul.f32 %v1381, %v1381
          %v1836 = vmul.f32 %v1382, %v1382
          %v1837 = vmul.f32 %v1383, %v1383
          %v1838 = vmul.f32 %v1384, %v1384
          %v1839 = vmul.f32 %v1385, %v1385
          %v1840 = vmul.f32 %v1386, %v1386
          %v1841 = vmul.f32 %v1387, %v1387
          %v1842 = vmul.f32 %v1388, %v1388
          %v1843 = vmul.f32 %v1389, %v1389
          %v1844 = vmul.f32 %v1390, %v1390
          %v1845 = vmul.f32 %v1391, %v1391
          %v1846 = vmul.f32 %v1392, %v1392
          %v1847 = vmul.f32 %v1393, %v1393
          %v1848 = vmul.f32 %v1394, %v1394
          %v1849 = vmul.f32 %v1395, %v1395
          %v1850 = vmul.f32 %v1396, %v1396
          %v1851 = vmul.f32 %v1397, %v1397
          %v1852 = vmul.f32 %v1398, %v1398
          %v1853 = vmul.f32 %v1399, %v1399
          %v1854 = vmul.f32 %v1400, %v1400
          %v1855 = vmul.f32 %v1401, %v1401
          %v1856 = vmul.f32 %v1402, %v1402
          %v1857 = vmul.f32 %v1403, %v1403
          %v1858 = vmul.f32 %v1404, %v1404
          %v1859 = vmul.f32 %v1405, %v1405
          %v1860 = vmul.f32 %v1406, %v1406
          %v1861 = vmul.f32 %v1407, %v1407
          %v1862 = vmul.f32 %v1408, %v1408
          %v1863 = vmul.f32 %v1409, %v1409
          %v1864 = vmul.f32 %v1410, %v1410
          %v1865 = vmul.f32 %v1411, %v1411
          %v1866 = vmul.f32 %v1412, %v1412
          %v1867 = vmul.f32 %v1413, %v1413
          %v1868 = vmul.f32 %v1414, %v1414
          %v1869 = vmul.f32 %v1415, %v1415
          %v1870 = vmul.f32 %v1416, %v1416
          %v1871 = vmul.f32 %v1417, %v1417
          %v1872 = vmul.f32 %v1418, %v1418
          %v1873 = vmul.f32 %v1419, %v1419
          %v1874 = vmul.f32 %v1420, %v1420
          %v1875 = vmul.f32 %v1421, %v1421
          %v1876 = vmul.f32 %v1422, %v1422
          %v1877 = vadd.f32 %v1813, %v1814
          %v1878 = vadd.f32 %v1877, %v1815
          %v1879 = vadd.f32 %v1878, %v1816
          %v1880 = vadd.f32 %v1879, %v1817
          %v1881 = vadd.f32 %v1880, %v1818
          %v1882 = vadd.f32 %v1881, %v1819
          %v1883 = vadd.f32 %v1882, %v1820
          %v1884 = vadd.f32 %v1883, %v1821
          %v1885 = vadd.f32 %v1884, %v1822
          %v1886 = vadd.f32 %v1885, %v1823
          %v1887 = vadd.f32 %v1886, %v1824
          %v1888 = vadd.f32 %v1887, %v1825
          %v1889 = vadd.f32 %v1888, %v1826
          %v1890 = vadd.f32 %v1889, %v1827
          %v1891 = vadd.f32 %v1890, %v1828
          %v1892 = vadd.f32 %v1891, %v1829
          %v1893 = vadd.f32 %v1892, %v1830
          %v1894 = vadd.f32 %v1893, %v1831
          %v1895 = vadd.f32 %v1894, %v1832
          %v1896 = vadd.f32 %v1895, %v1833
          %v1897 = vadd.f32 %v1896, %v1834
          %v1898 = vadd.f32 %v1897, %v1835
          %v1899 = vadd.f32 %v1898, %v1836
          %v1900 = vadd.f32 %v1899, %v1837
          %v1901 = vadd.f32 %v1900, %v1838
          %v1902 = vadd.f32 %v1901, %v1839
          %v1903 = vadd.f32 %v1902, %v1840
          %v1904 = vadd.f32 %v1903, %v1841
          %v1905 = vadd.f32 %v1904, %v1842
          %v1906 = vadd.f32 %v1905, %v1843
          %v1907 = vadd.f32 %v1906, %v1844
          %v1908 = vadd.f32 %v1907, %v1845
          %v1909 = vadd.f32 %v1908, %v1846
          %v1910 = vadd.f32 %v1909, %v1847
          %v1911 = vadd.f32 %v1910, %v1848
          %v1912 = vadd.f32 %v1911, %v1849
          %v1913 = vadd.f32 %v1912, %v1850
          %v1914 = vadd.f32 %v1913, %v1851
          %v1915 = vadd.f32 %v1914, %v1852
          %v1916 = vadd.f32 %v1915, %v1853
          %v1917 = vadd.f32 %v1916, %v1854
          %v1918 = vadd.f32 %v1917, %v1855
          %v1919 = vadd.f32 %v1918, %v1856
          %v1920 = vadd.f32 %v1919, %v1857
          %v1921 = vadd.f32 %v1920, %v1858
          %v1922 = vadd.f32 %v1921, %v1859
          %v1923 = vadd.f32 %v1922, %v1860
          %v1924 = vadd.f32 %v1923, %v1861
          %v1925 = vadd.f32 %v1924, %v1862
          %v1926 = vadd.f32 %v1925, %v1863
          %v1927 = vadd.f32 %v1926, %v1864
          %v1928 = vadd.f32 %v1927, %v1865
          %v1929 = vadd.f32 %v1928, %v1866
          %v1930 = vadd.f32 %v1929, %v1867
          %v1931 = vadd.f32 %v1930, %v1868
          %v1932 = vadd.f32 %v1931, %v1869
          %v1933 = vadd.f32 %v1932, %v1870
          %v1934 = vadd.f32 %v1933, %v1871
          %v1935 = vadd.f32 %v1934, %v1872
          %v1936 = vadd.f32 %v1935, %v1873
          %v1937 = vadd.f32 %v1936, %v1874
          %v1938 = vadd.f32 %v1937, %v1875
          %v1939 = vadd.f32 %v1938, %v1876
          %v1940 = vrot.slane %v1939, 4
          %v1941 = vadd.f32 %v1939, %v1940
          %v1942 = vrot.slane %v1941, 2
          %v1943 = vadd.f32 %v1941, %v1942
          %v1944 = vrot.slane %v1943, 1
          %v1945 = vadd.f32 %v1943, %v1944
          %1946 = vst [vmem:[%s289] sm:$0xff] %v1945
        $region44: #{tpu_custom_call.1} parent=27 // pred_fallthru
          _
        %s1947 = sand.u32 %s111, 1
        %s1948 = scalar_lea.sflag [#allocation5], %s1947
        %s1949 = sand.u32 %s111, 1
        %s1950 = smul.addr %s1949, 256
        %s1951 = scalar_lea.vmem [#allocation8], %s1950
        %s1952 = sand.u32 %s26, 1
        %s1953 = scalar_lea.sflag [#allocation10], %s1952
        %s1954 = sand.u32 %s139, 1
        %s1955 = smul.addr %s1954, 8
        %s1956 = scalar_lea.vmem [#allocation9], %s1955
        %s1957 = sand.u32 %s26, 1
        %s1958 = scalar_lea.sflag [#allocation10], %s1957
        %s1959 = sand.u32 %s167, 1
        %s1960 = smul.addr %s1959, 8
        %s1961 = scalar_lea.vmem [#allocation11], %s1960
        // Predicated region
        $region45: #{tpu_custom_call.1} parent=27 // pred_check
          %p1962 = pneg %p121
        $region46: #{tpu_custom_call.1} parent=27 // pred_check_branch
          %1964 = sbr.rel (%p1962) target = $region48
        $region47: #{tpu_custom_call.1} parent=27 // pred_region
          %s1965 = smul.u32 64, %s31
          %s1967 = ssub.s32 4096, 4096
          %1968 = vsyncadd %s1948, %s1967
          %s1969 = sadd.s32 %s32, %s1965
          %s1970 = smul.addr %s1969, 64
          %s1971 = scalar_lea.hbm %s2, %s1970
          %s1972 = sshll.u32 %s1951, 4
          %s1973 = int_to_ptr.vmem [resolvable:$true] %s1972
          %1978 = dma.vmem_to_hbm [thread:$0]  %s1973, 4096, %s1971, %s1948, 64, 64, 4
        $region48: #{tpu_custom_call.1} parent=27 // pred_fallthru
          _
        // Predicated region
        $region49: #{tpu_custom_call.1} parent=27 // pred_check
          %p1979 = pneg %p149
        $region50: #{tpu_custom_call.1} parent=27 // pred_check_branch
          %1981 = sbr.rel (%p1979) target = $region52
        $region51: #{tpu_custom_call.1} parent=27 // pred_region
          %s1983 = ssub.s32 128, 128
          %1984 = vsyncadd %s1953, %s1983
          %s1985 = sadd.s32 %s32, %s31
          %s1986 = smul.addr %s1985, 128
          %s1987 = scalar_lea.hbm %s3, %s1986
          %s1989 = sshll.u32 %s1956, 4
          %s1990 = int_to_ptr.vmem [resolvable:$true] %s1989
          %1992 = dma.vmem_to_hbm [thread:$0]  %s1990, 128, %s1987, %s1953
        $region52: #{tpu_custom_call.1} parent=27 // pred_fallthru
          _
        // Predicated region
        $region53: #{tpu_custom_call.1} parent=27 // pred_check
          %p1993 = pneg %p177
        $region54: #{tpu_custom_call.1} parent=27 // pred_check_branch
          %1995 = sbr.rel (%p1993) target = $region56
        $region55: #{tpu_custom_call.1} parent=27 // pred_region
          %s1997 = ssub.s32 128, 128
          %1998 = vsyncadd %s1958, %s1997
          %s1999 = sadd.s32 %s32, %s31
          %s2000 = smul.addr %s1999, 128
          %s2001 = scalar_lea.hbm %s4, %s2000
          %s2003 = sshll.u32 %s1961, 4
          %s2004 = int_to_ptr.vmem [resolvable:$true] %s2003
          %2006 = dma.vmem_to_hbm [thread:$0]  %s2004, 128, %s2001, %s1958
        $region56: #{tpu_custom_call.1} parent=27 // pred_fallthru
          _
      $region28: #{tpu_custom_call.1} parent=5 // pred_fallthru
        _
      %p2007 = scmp.le.s32.totalorder 2, %s21
      // Predicated region
      $region57: #{tpu_custom_call.1} parent=5 // pred_check
        %p2008 = pneg %p2007
      $region58: #{tpu_custom_call.1} parent=5 // pred_check_branch
        %2010 = sbr.rel (%p2008) target = $region60
      $region59: #{tpu_custom_call.1} parent=5 // pred_region
        %s2011 = ssub.s32 %s21, 2
        // Predicated region
        $region61: #{tpu_custom_call.1} parent=59 // pred_check
          %p2012 = pneg %p127
        $region62: #{tpu_custom_call.1} parent=59 // pred_check_branch
          %2014 = sbr.rel (%p2012) target = $region64
        $region63: #{tpu_custom_call.1} parent=59 // pred_region
          %s2015 = sand.u32 %s112, 1
          %s2016 = scalar_lea.sflag [#allocation5], %s2015
          %s2017 = sand.u32 %s112, 1
          %s2018 = smul.addr %s2017, 256
          %s2019 = scalar_lea.vmem [#allocation8], %s2018
          %2020 = dma.done %s2016, 4096
        $region64: #{tpu_custom_call.1} parent=59 // pred_fallthru
          _
        // Predicated region
        $region65: #{tpu_custom_call.1} parent=59 // pred_check
          %p2021 = pneg %p155
        $region66: #{tpu_custom_call.1} parent=59 // pred_check_branch
          %2023 = sbr.rel (%p2021) target = $region68
        $region67: #{tpu_custom_call.1} parent=59 // pred_region
          %s2024 = sand.u32 %s27, 1
          %s2025 = scalar_lea.sflag [#allocation10], %s2024
          %s2026 = sand.u32 %s140, 1
          %s2027 = smul.addr %s2026, 8
          %s2028 = scalar_lea.vmem [#allocation9], %s2027
          %2029 = dma.done %s2025, 128
        $region68: #{tpu_custom_call.1} parent=59 // pred_fallthru
          _
        // Predicated region
        $region69: #{tpu_custom_call.1} parent=59 // pred_check
          %p2030 = pneg %p183
        $region70: #{tpu_custom_call.1} parent=59 // pred_check_branch
          %2032 = sbr.rel (%p2030) target = $region72
        $region71: #{tpu_custom_call.1} parent=59 // pred_region
          %s2033 = sand.u32 %s27, 1
          %s2034 = scalar_lea.sflag [#allocation10], %s2033
          %s2035 = sand.u32 %s168, 1
          %s2036 = smul.addr %s2035, 8
          %s2037 = scalar_lea.vmem [#allocation11], %s2036
          %2038 = dma.done %s2034, 128
        $region72: #{tpu_custom_call.1} parent=59 // pred_fallthru
          _
      $region60: #{tpu_custom_call.1} parent=5 // pred_fallthru
        _
    $region6: #{tpu_custom_call.1} parent=1 // loop_footer
      %s25 = sadd.s32 1, %s21
    $region7: #{tpu_custom_call.1} parent=1 // loop_footer_branch
      %20 = sbr.rel target = $region3
    $region8: #{tpu_custom_call.1} parent=1 // loop_exit
      _
    %2039 = vsyncpa [#allocation4], 1
    %s2040 = scalar_lea.sflag [#allocation4], 1
    %2041 = vsyncpa %s2040, 1
    %2042 = vsyncpa [#allocation7], 1
    %2043 = vsyncpa [#allocation5], 1
    %s2044 = scalar_lea.sflag [#allocation5], 1
    %2045 = vsyncpa %s2044, 1
    %2046 = vsyncpa [#allocation10], 1
    %s2047 = scalar_lea.sflag [#allocation10], 1
    %2048 = vsyncpa %s2047, 1

</llo_original>
